<compile_context>
chip_gen: v7x
topology: tpu7x:2x2x1
jax: 0.10.0
libtpu: 0.0.40
codegen_flags: <defaults>
</compile_context>

<pallas_src>
import functools

import jax
import jax.numpy as jnp
from jax.experimental import pallas as pl
from jax.experimental.pallas import tpu as pltpu


def _densnet_kernel(x_ref, w1_ref, b1_ref, w2_ref, b2_ref, o_ref, *,
                    out_channels, input_scale, block_t_out, training):
    S = input_scale
    w1 = w1_ref[...]                       # (C, C)
    b1 = b1_ref[...]                       # (C, 1)

    acc = jnp.zeros((out_channels, block_t_out), jnp.float32)
    # Unrolled static loop over the S decimation phases (S is small and
    # compile-time constant).  x_ref[0, s] / w2_ref[s] are leading-axis ref
    # indices -> zero-cost views, no in-kernel slice/concat copies.
    for s in range(S):
        h = jnp.maximum(x_ref[0, s].astype(jnp.float32), 0.0)        # relu(x), phase s
        y = jnp.dot(w1, h, preferred_element_type=jnp.float32) + b1  # 1x1 conv1
        y = jnp.maximum(y, 0.0)                                       # relu
        acc = acc + jnp.dot(w2_ref[s], y,
                            preferred_element_type=jnp.float32)      # conv2, phase s
    out = acc + b2_ref[...]                                           # (O, T_tile)

    if not training:   # eval-mode nonlinearity (PyTorch: `if not self.training`)
        # Exact divides: they run once per output tile and cost nothing, and
        # avoid the ~1e-3 relative error of the EUP approx reciprocal.
        if out_channels == 1:
            out = 1.0 / (1.0 + jnp.exp(-out))                # sigmoid
        else:
            m = jnp.max(out, axis=0, keepdims=True)          # softmax over channels
            e = jnp.exp(out - m)
            out = e / jnp.sum(e, axis=0, keepdims=True)
    o_ref[0] = out.astype(o_ref.dtype)


def _pick_block_t_out(t_out, batch):
    """Largest lane-dense (multiple-of-128) time tile dividing T_out while
    keeping at least 2 grid steps (v7x has 2 TensorCores per chip)."""
    assert t_out % 128 == 0, (
        "T // input_scale must be a multiple of 128; pad T upstream "
        f"(got T_out={t_out})")
    # TODO(synk): wrapper-side zero-padding of T for non-128-multiple T_out.
    for cand in (4096, 2048, 1024, 512, 384, 256, 128):
        if t_out % cand == 0 and (batch * (t_out // cand) >= 2 or cand == 128):
            return cand
    return 128


def densnet_forward(x, w1, b1, w2, b2, *, input_scale, training=False,
                    block_t_out=None):
    """x: (B, C, T) f32/bf16; w1: (C, C) [torch conv1 weight squeezed];
    b1: (C,); w2: (O, C, S) [torch conv2 weight]; b2: (O,).
    Returns (B, O, T // S) in x's dtype."""
    B, C, T = x.shape
    O, Cw, S = w2.shape
    assert Cw == C and S == input_scale
    assert T % S == 0, "time length must be divisible by input_scale"
    T_out = T // S

    if block_t_out is None:
        block_t_out = _pick_block_t_out(T_out, B)
    assert T_out % block_t_out == 0 and block_t_out % 128 == 0
    n_t = T_out // block_t_out

    # One-time relayout of x: the stride-S decimation commutes with relu and
    # the 1x1 conv1, so hoist it out of the kernel entirely.
    # (B, C, T) -> (B, S, C, T_out) with xr[b, s, c, t] = x[b, c, t*S + s].
    # A single cheap XLA transpose (one extra read+write of x) replaces the
    # old per-tile (t_blk x t_blk) deinterleave matmul.
    xr = jnp.transpose(x.reshape(B, C, T_out, S), (0, 3, 1, 2))

    # Parameter prep (tiny): conv2 weight in phase-major layout (S, O, C) so
    # the kernel indexes w2_ref[s] -> (O, C); biases as f32 columns.
    w1f = w1.astype(jnp.float32)
    b1c = b1.reshape(C, 1).astype(jnp.float32)
    w2r = jnp.transpose(w2, (2, 0, 1)).astype(jnp.float32)
    b2c = b2.reshape(O, 1).astype(jnp.float32)

    kernel = functools.partial(
        _densnet_kernel, out_channels=O, input_scale=S,
        block_t_out=block_t_out, training=training)

    # VMEM budget from actual buffer needs: double-buffered x/out tiles plus
    # the (tiny, conservatively also double-buffered) constant params, with
    # 2x headroom, clamped to 40 MiB so it always fits v7x's 64 MiB physical
    # VMEM.  (The constants are a few KiB here; pl.Buffered(1) on their
    # BlockSpecs only becomes worthwhile if C/O grow to 128+.)
    item_x = jnp.dtype(x.dtype).itemsize
    tile_bytes = 2 * (S * C * block_t_out * item_x + O * block_t_out * item_x)
    param_bytes = 2 * 4 * (C * C + C + S * O * C + O)
    vmem_limit = int(min(40 << 20, max(16 << 20, 2 * (tile_bytes + param_bytes))))

    return pl.pallas_call(
        kernel,
        out_shape=jax.ShapeDtypeStruct((B, O, T_out), x.dtype),
        grid_spec=pltpu.PrefetchScalarGridSpec(
            num_scalar_prefetch=0,
            grid=(B, n_t),                                   # no reduction axis
            in_specs=[
                pl.BlockSpec((1, S, C, block_t_out),
                             lambda b, t: (b, 0, 0, t)),     # x, phase-major
                pl.BlockSpec((C, C), lambda b, t: (0, 0)),   # w1
                pl.BlockSpec((C, 1), lambda b, t: (0, 0)),   # b1
                pl.BlockSpec((S, O, C), lambda b, t: (0, 0, 0)),  # w2 phase-major
                pl.BlockSpec((O, 1), lambda b, t: (0, 0)),   # b2
            ],
            out_specs=pl.BlockSpec((1, O, block_t_out), lambda b, t: (b, 0, t)),
        ),
        compiler_params=pltpu.CompilerParams(
            dimension_semantics=("parallel", "parallel"),
            vmem_limit_bytes=vmem_limit),
    )(xr, w1f, b1c, w2r, b2c)


def _ref_forward(x, w1, b1, w2, b2, *, input_scale, training=False):
    """Pure-JAX reference mirroring the PyTorch module."""
    h = jnp.maximum(x, 0.0)
    y = jnp.einsum('oc,bct->bot', w1, h) + b1[None, :, None]
    y = jnp.maximum(y, 0.0)
    B, C, T = y.shape
    S = input_scale
    T_out = T // S
    yr = y.reshape(B, C, T_out, S)
    out = jnp.einsum('ocs,bcts->bot', w2, yr) + b2[None, :, None]
    if not training:
        if w2.shape[0] == 1:
            out = jax.nn.sigmoid(out)
        else:
            out = jax.nn.softmax(out, axis=1)
    return out


if __name__ == "__main__":
    # Small config consistent with the module; T_out = 512 -> one 512-lane
    # output tile per batch element, so grid = (2, 1) keeps 2 parallel steps.
    B, C, T = 2, 8, 2048
    O, S = 4, 4

    key = jax.random.PRNGKey(0)
    k1, k2, k3, k4, kx = jax.random.split(key, 5)
    # Deterministic synthetic parameters (torch conv1 weight (C, C, 1) -> (C, C)).
    w1 = 0.2 * jax.random.normal(k1, (C, C), jnp.float32)
    b1 = 0.1 * jax.random.normal(k2, (C,), jnp.float32)
    w2 = 0.2 * jax.random.normal(k3, (O, C, S), jnp.float32)
    b2 = 0.1 * jax.random.normal(k4, (O,), jnp.float32)
    x = jax.random.normal(kx, (B, C, T), jnp.float32)

    out = densnet_forward(x, w1, b1, w2, b2, input_scale=S, training=False)
    out = jax.block_until_ready(out)

    ref = _ref_forward(x, w1, b1, w2, b2, input_scale=S, training=False)
    assert out.shape == (B, O, T // S)
    # Exact softmax divide in the kernel -> tight tolerance.
    assert jnp.allclose(out, ref, atol=1e-5, rtol=1e-5), "mismatch vs reference"

    print("KERNEL_OK")
</pallas_src>

<mosaic_0001>
module attributes {stable_mosaic.version = 11 : i64} {
  func.func @_densnet_kernel(%arg0: i32, %arg1: i32, %arg2: memref<1x4x8x512xf32, #tpu.memory_space<vmem>>, %arg3: memref<8x8xf32, #tpu.memory_space<vmem>>, %arg4: memref<8x1xf32, #tpu.memory_space<vmem>>, %arg5: memref<4x4x8xf32, #tpu.memory_space<vmem>>, %arg6: memref<4x1xf32, #tpu.memory_space<vmem>>, %arg7: memref<1x4x512xf32, #tpu.memory_space<vmem>>) attributes {dimension_semantics = [#tpu.dimension_semantics<parallel>, #tpu.dimension_semantics<parallel>], iteration_bounds = array<i64: 2, 1>, scalar_prefetch = 0 : i64, scratch_operands = 0 : i64, tpu.core_type = #tpu.core_type<tc>, window_params = [{transform_indices = @transform_0, window_bounds = array<i64: 1, 4, 8, 512>}, {pipeline_mode = #tpu.pipeline_mode<synchronous>, transform_indices = @transform_1, window_bounds = array<i64: 8, 8>}, {pipeline_mode = #tpu.pipeline_mode<synchronous>, transform_indices = @transform_2, window_bounds = array<i64: 8, 1>}, {pipeline_mode = #tpu.pipeline_mode<synchronous>, transform_indices = @transform_3, window_bounds = array<i64: 4, 4, 8>}, {pipeline_mode = #tpu.pipeline_mode<synchronous>, transform_indices = @transform_4, window_bounds = array<i64: 4, 1>}, {transform_indices = @transform_5, window_bounds = array<i64: 1, 4, 512>}]} {
    %c0 = arith.constant 0 : index
    %c0_0 = arith.constant 0 : index
    %0 = vector.load %arg3[%c0, %c0_0] : memref<8x8xf32, #tpu.memory_space<vmem>>, vector<8x8xf32>
    %c0_1 = arith.constant 0 : index
    %c0_2 = arith.constant 0 : index
    %1 = vector.load %arg4[%c0_1, %c0_2] : memref<8x1xf32, #tpu.memory_space<vmem>>, vector<8x1xf32>
    %cst = arith.constant 0.000000e+00 : f32
    %2 = vector.broadcast %cst : f32 to vector<4x512xf32>
    %c0_3 = arith.constant 0 : index
    %c0_4 = arith.constant 0 : index
    %c0_5 = arith.constant 0 : index
    %c0_6 = arith.constant 0 : index
    %3 = vector.load %arg2[%c0_3, %c0_4, %c0_5, %c0_6] : memref<1x4x8x512xf32, #tpu.memory_space<vmem>>, vector<1x1x8x512xf32>
    %4 = vector.shape_cast %3 : vector<1x1x8x512xf32> to vector<8x512xf32>
    %cst_7 = arith.constant 0.000000e+00 : f32
    %5 = vector.broadcast %cst_7 : f32 to vector<8x512xf32>
    %6 = arith.maximumf %4, %5 : vector<8x512xf32>
    %cst_8 = arith.constant dense<0.000000e+00> : vector<8x512xf32>
    %7 = tpu.matmul %0, %6, %cst_8 {dimension_numbers = #tpu.dot_dimension_numbers<[1], [0], [0], [1], [0, 0, 1, 1], [], []>} : vector<8x8xf32>, vector<8x512xf32>, vector<8x512xf32> -> vector<8x512xf32>
    %8 = vector.broadcast %1 : vector<8x1xf32> to vector<8x512xf32>
    %9 = arith.addf %7, %8 : vector<8x512xf32>
    %cst_9 = arith.constant 0.000000e+00 : f32
    %10 = vector.broadcast %cst_9 : f32 to vector<8x512xf32>
    %11 = arith.maximumf %9, %10 : vector<8x512xf32>
    %c0_10 = arith.constant 0 : index
    %c0_11 = arith.constant 0 : index
    %c0_12 = arith.constant 0 : index
    %12 = vector.load %arg5[%c0_10, %c0_11, %c0_12] : memref<4x4x8xf32, #tpu.memory_space<vmem>>, vector<1x4x8xf32>
    %13 = vector.shape_cast %12 : vector<1x4x8xf32> to vector<4x8xf32>
    %cst_13 = arith.constant dense<0.000000e+00> : vector<4x512xf32>
    %14 = tpu.matmul %13, %11, %cst_13 {dimension_numbers = #tpu.dot_dimension_numbers<[1], [0], [0], [1], [0, 0, 1, 1], [], []>} : vector<4x8xf32>, vector<8x512xf32>, vector<4x512xf32> -> vector<4x512xf32>
    %15 = arith.addf %2, %14 : vector<4x512xf32>
    %c0_14 = arith.constant 0 : index
    %c1 = arith.constant 1 : index
    %c0_15 = arith.constant 0 : index
    %c0_16 = arith.constant 0 : index
    %16 = vector.load %arg2[%c0_14, %c1, %c0_15, %c0_16] : memref<1x4x8x512xf32, #tpu.memory_space<vmem>>, vector<1x1x8x512xf32>
    %17 = vector.shape_cast %16 : vector<1x1x8x512xf32> to vector<8x512xf32>
    %cst_17 = arith.constant 0.000000e+00 : f32
    %18 = vector.broadcast %cst_17 : f32 to vector<8x512xf32>
    %19 = arith.maximumf %17, %18 : vector<8x512xf32>
    %cst_18 = arith.constant dense<0.000000e+00> : vector<8x512xf32>
    %20 = tpu.matmul %0, %19, %cst_18 {dimension_numbers = #tpu.dot_dimension_numbers<[1], [0], [0], [1], [0, 0, 1, 1], [], []>} : vector<8x8xf32>, vector<8x512xf32>, vector<8x512xf32> -> vector<8x512xf32>
    %21 = vector.broadcast %1 : vector<8x1xf32> to vector<8x512xf32>
    %22 = arith.addf %20, %21 : vector<8x512xf32>
    %cst_19 = arith.constant 0.000000e+00 : f32
    %23 = vector.broadcast %cst_19 : f32 to vector<8x512xf32>
    %24 = arith.maximumf %22, %23 : vector<8x512xf32>
    %c1_20 = arith.constant 1 : index
    %c0_21 = arith.constant 0 : index
    %c0_22 = arith.constant 0 : index
    %25 = vector.load %arg5[%c1_20, %c0_21, %c0_22] : memref<4x4x8xf32, #tpu.memory_space<vmem>>, vector<1x4x8xf32>
    %26 = vector.shape_cast %25 : vector<1x4x8xf32> to vector<4x8xf32>
    %cst_23 = arith.constant dense<0.000000e+00> : vector<4x512xf32>
    %27 = tpu.matmul %26, %24, %cst_23 {dimension_numbers = #tpu.dot_dimension_numbers<[1], [0], [0], [1], [0, 0, 1, 1], [], []>} : vector<4x8xf32>, vector<8x512xf32>, vector<4x512xf32> -> vector<4x512xf32>
    %28 = arith.addf %15, %27 : vector<4x512xf32>
    %c0_24 = arith.constant 0 : index
    %c2 = arith.constant 2 : index
    %c0_25 = arith.constant 0 : index
    %c0_26 = arith.constant 0 : index
    %29 = vector.load %arg2[%c0_24, %c2, %c0_25, %c0_26] : memref<1x4x8x512xf32, #tpu.memory_space<vmem>>, vector<1x1x8x512xf32>
    %30 = vector.shape_cast %29 : vector<1x1x8x512xf32> to vector<8x512xf32>
    %cst_27 = arith.constant 0.000000e+00 : f32
    %31 = vector.broadcast %cst_27 : f32 to vector<8x512xf32>
    %32 = arith.maximumf %30, %31 : vector<8x512xf32>
    %cst_28 = arith.constant dense<0.000000e+00> : vector<8x512xf32>
    %33 = tpu.matmul %0, %32, %cst_28 {dimension_numbers = #tpu.dot_dimension_numbers<[1], [0], [0], [1], [0, 0, 1, 1], [], []>} : vector<8x8xf32>, vector<8x512xf32>, vector<8x512xf32> -> vector<8x512xf32>
    %34 = vector.broadcast %1 : vector<8x1xf32> to vector<8x512xf32>
    %35 = arith.addf %33, %34 : vector<8x512xf32>
    %cst_29 = arith.constant 0.000000e+00 : f32
    %36 = vector.broadcast %cst_29 : f32 to vector<8x512xf32>
    %37 = arith.maximumf %35, %36 : vector<8x512xf32>
    %c2_30 = arith.constant 2 : index
    %c0_31 = arith.constant 0 : index
    %c0_32 = arith.constant 0 : index
    %38 = vector.load %arg5[%c2_30, %c0_31, %c0_32] : memref<4x4x8xf32, #tpu.memory_space<vmem>>, vector<1x4x8xf32>
    %39 = vector.shape_cast %38 : vector<1x4x8xf32> to vector<4x8xf32>
    %cst_33 = arith.constant dense<0.000000e+00> : vector<4x512xf32>
    %40 = tpu.matmul %39, %37, %cst_33 {dimension_numbers = #tpu.dot_dimension_numbers<[1], [0], [0], [1], [0, 0, 1, 1], [], []>} : vector<4x8xf32>, vector<8x512xf32>, vector<4x512xf32> -> vector<4x512xf32>
    %41 = arith.addf %28, %40 : vector<4x512xf32>
    %c0_34 = arith.constant 0 : index
    %c3 = arith.constant 3 : index
    %c0_35 = arith.constant 0 : index
    %c0_36 = arith.constant 0 : index
    %42 = vector.load %arg2[%c0_34, %c3, %c0_35, %c0_36] : memref<1x4x8x512xf32, #tpu.memory_space<vmem>>, vector<1x1x8x512xf32>
    %43 = vector.shape_cast %42 : vector<1x1x8x512xf32> to vector<8x512xf32>
    %cst_37 = arith.constant 0.000000e+00 : f32
    %44 = vector.broadcast %cst_37 : f32 to vector<8x512xf32>
    %45 = arith.maximumf %43, %44 : vector<8x512xf32>
    %cst_38 = arith.constant dense<0.000000e+00> : vector<8x512xf32>
    %46 = tpu.matmul %0, %45, %cst_38 {dimension_numbers = #tpu.dot_dimension_numbers<[1], [0], [0], [1], [0, 0, 1, 1], [], []>} : vector<8x8xf32>, vector<8x512xf32>, vector<8x512xf32> -> vector<8x512xf32>
    %47 = vector.broadcast %1 : vector<8x1xf32> to vector<8x512xf32>
    %48 = arith.addf %46, %47 : vector<8x512xf32>
    %cst_39 = arith.constant 0.000000e+00 : f32
    %49 = vector.broadcast %cst_39 : f32 to vector<8x512xf32>
    %50 = arith.maximumf %48, %49 : vector<8x512xf32>
    %c3_40 = arith.constant 3 : index
    %c0_41 = arith.constant 0 : index
    %c0_42 = arith.constant 0 : index
    %51 = vector.load %arg5[%c3_40, %c0_41, %c0_42] : memref<4x4x8xf32, #tpu.memory_space<vmem>>, vector<1x4x8xf32>
    %52 = vector.shape_cast %51 : vector<1x4x8xf32> to vector<4x8xf32>
    %cst_43 = arith.constant dense<0.000000e+00> : vector<4x512xf32>
    %53 = tpu.matmul %52, %50, %cst_43 {dimension_numbers = #tpu.dot_dimension_numbers<[1], [0], [0], [1], [0, 0, 1, 1], [], []>} : vector<4x8xf32>, vector<8x512xf32>, vector<4x512xf32> -> vector<4x512xf32>
    %54 = arith.addf %41, %53 : vector<4x512xf32>
    %c0_44 = arith.constant 0 : index
    %c0_45 = arith.constant 0 : index
    %55 = vector.load %arg6[%c0_44, %c0_45] : memref<4x1xf32, #tpu.memory_space<vmem>>, vector<4x1xf32>
    %56 = vector.broadcast %55 : vector<4x1xf32> to vector<4x512xf32>
    %57 = arith.addf %54, %56 : vector<4x512xf32>
    %cst_46 = arith.constant dense<0xFF800000> : vector<512xf32>
    %58 = vector.multi_reduction <maximumf>, %57, %cst_46 [0] : vector<4x512xf32> to vector<512xf32>
    %59 = vector.shape_cast %58 : vector<512xf32> to vector<1x512xf32>
    %60 = vector.broadcast %59 : vector<1x512xf32> to vector<4x512xf32>
    %61 = arith.subf %57, %60 : vector<4x512xf32>
    %62 = math.exp %61 : vector<4x512xf32>
    %cst_47 = arith.constant dense<0.000000e+00> : vector<512xf32>
    %63 = vector.multi_reduction <add>, %62, %cst_47 [0] : vector<4x512xf32> to vector<512xf32>
    %64 = vector.shape_cast %63 : vector<512xf32> to vector<1x512xf32>
    %65 = vector.broadcast %64 : vector<1x512xf32> to vector<4x512xf32>
    %66 = arith.divf %62, %65 : vector<4x512xf32>
    %c0_48 = arith.constant 0 : index
    %c0_49 = arith.constant 0 : index
    %c0_50 = arith.constant 0 : index
    %67 = vector.load %arg7[%c0_48, %c0_49, %c0_50] : memref<1x4x512xf32, #tpu.memory_space<vmem>>, vector<1x4x512xf32>
    %68 = vector.shape_cast %67 : vector<1x4x512xf32> to vector<4x512xf32>
    %69 = vector.shape_cast %66 : vector<4x512xf32> to vector<1x4x512xf32>
    tpu.vector_store %arg7[%c0_48, %c0_49, %c0_50], %69 {strides = array<i32>} : memref<1x4x512xf32, #tpu.memory_space<vmem>>, vector<1x4x512xf32>,
    return
  }
  func.func @transform_0(%arg0: i32, %arg1: i32) -> (i32, i32, i32, i32) {
    %c0_i32 = arith.constant 0 : i32
    %c0_i32_0 = arith.constant 0 : i32
    %c0_i32_1 = arith.constant 0 : i32
    return %arg0, %c0_i32, %c0_i32_0, %arg1 : i32, i32, i32, i32
  }
  func.func @transform_1(%arg0: i32, %arg1: i32) -> (i32, i32) {
    %c0_i32 = arith.constant 0 : i32
    %c0_i32_0 = arith.constant 0 : i32
    %c0_i32_1 = arith.constant 0 : i32
    return %c0_i32, %c0_i32_0 : i32, i32
  }
  func.func @transform_2(%arg0: i32, %arg1: i32) -> (i32, i32) {
    %c0_i32 = arith.constant 0 : i32
    %c0_i32_0 = arith.constant 0 : i32
    %c0_i32_1 = arith.constant 0 : i32
    return %c0_i32, %c0_i32_0 : i32, i32
  }
  func.func @transform_3(%arg0: i32, %arg1: i32) -> (i32, i32, i32) {
    %c0_i32 = arith.constant 0 : i32
    %c0_i32_0 = arith.constant 0 : i32
    %c0_i32_1 = arith.constant 0 : i32
    %c0_i32_2 = arith.constant 0 : i32
    return %c0_i32, %c0_i32_0, %c0_i32_1 : i32, i32, i32
  }
  func.func @transform_4(%arg0: i32, %arg1: i32) -> (i32, i32) {
    %c0_i32 = arith.constant 0 : i32
    %c0_i32_0 = arith.constant 0 : i32
    %c0_i32_1 = arith.constant 0 : i32
    return %c0_i32, %c0_i32_0 : i32, i32
  }
  func.func @transform_5(%arg0: i32, %arg1: i32) -> (i32, i32, i32) {
    %c0_i32 = arith.constant 0 : i32
    %c0_i32_0 = arith.constant 0 : i32
    return %arg0, %c0_i32, %arg1 : i32, i32, i32
  }
}

</mosaic_0001>

<llo_original>
// kernel: tpu_custom_call.1
$region0: #{tpu_custom_call.1}
  #allocation0 [shape = 'u32[]', space=smem, size = 0x4, offset = 0x4, fixed_abs, tag = 'smem constant byte address 0x4 - core index']
  #allocation1 [shape = 'u32[144,128]{1,0:T(1,128)}', space=vmem, size = 0x12000, scoped, tag = 'internal scratch']
  %s0 = inlined_call_operand.hbm [shape: f32[2,4,8,512], index: 0, kind: input, shape index: {}]
  %s1 = inlined_call_operand.vmem [shape: f32[8,8], index: 1, kind: input, shape index: {}]
  %s2 = inlined_call_operand.vmem [shape: f32[8,1], index: 2, kind: input, shape index: {}]
  %s3 = inlined_call_operand.vmem [shape: f32[4,4,8], index: 3, kind: input, shape index: {}]
  %s4 = inlined_call_operand.vmem [shape: f32[4,1], index: 4, kind: input, shape index: {}]
  %s5 = inlined_call_operand.hbm [shape: f32[2,4,512], index: 5, kind: output, shape index: {}]
  %s6 = sld [smem:[#allocation0]]
  $region57: #{tpu_custom_call.1} parent=0
    _
  %s8 = ssub.s32 1, %s6
  %s9 = scalar_select 0, %s8, %s6
  $region1: #{tpu_custom_call.1} parent=0
    #allocation2 [shape = 'u8[131072]{0}', space=vmem, size = 0x20000, scoped, tag = 'input window, operand 0']
    #allocation3 [shape = 's32[2]{0}', space=sflag, size = 0x8, scoped, tag = 'scoped memory for tpu_custom_call.1']
    #allocation4 [shape = 's32[2]{0}', space=sflag, size = 0x8, scoped, tag = 'scoped memory for tpu_custom_call.1']
    #allocation5 [shape = 'u8[16384]{0}', space=vmem, size = 0x4000, scoped, tag = 'output window, operand 0']
    %10 = vsyncpa [#allocation3], 0
    %s11 = scalar_lea.sflag [#allocation3], 1
    %12 = vsyncpa %s11, 0
    %13 = vsyncpa [#allocation4], 0
    %s14 = scalar_lea.sflag [#allocation4], 1
    %15 = vsyncpa %s14, 0
    loop: start=0, step=1, limit=4
    $region2: #{tpu_custom_call.1} parent=1 // loop_pre_header
      _
    $region3: #{tpu_custom_call.1} parent=1 // loop_header
      %s17 = sphi 0, %s21
      %p18 = scmp.ge.s32.totalorder %s17, 4
      %s24 = sphi 0, %s36
      %s25 = sphi 0, %s32
      %s26 = sphi 0, %s24
      %s27 = sphi 0, %s25
      %s28 = sphi 0, %s26
      %s29 = sphi 0, %s27
      %s41 = sphi 0, %s43
      %s44 = sphi 0, %s41
      %s45 = sphi 0, %s44
      %s61 = sphi 0, %s45
      %s65 = sphi 0, %s65
      %s67 = sphi 0, %s65
      %s68 = sphi 0, %s67
      %s82 = sphi 0, %s68
      %s86 = sphi 0, %s86
      %s88 = sphi 0, %s86
      %s89 = sphi 0, %s88
      %s103 = sphi 0, %s89
      %s107 = sphi 0, %s107
      %s109 = sphi 0, %s107
      %s110 = sphi 0, %s109
      %s124 = sphi 0, %s110
      %s128 = sphi 0, %s128
      %s130 = sphi 0, %s128
      %s131 = sphi 0, %s130
      %s145 = sphi 0, %s131
      %s153 = sphi 0, %s155
      %s156 = sphi 0, %s153
      %s157 = sphi 0, %s156
      %s173 = sphi 0, %s157
    $region4: #{tpu_custom_call.1} parent=1 // loop_header_branch
      %20 = sbr.rel (%p18) target = $region8
    $region5: #{tpu_custom_call.1} parent=1 // loop_body
      %s22 = ssub.s32 %s17, 1
      %s23 = ssub.s32 %s17, 2
      %s30 = sadd.s32 1, %s25
      %p31 = scmp.ge.s32.totalorder %s30, 1
      %s32 = scalar_select %p31, 0, %s30
      %s33 = sadd.s32 1, %s24
      %s34 = scalar_select %p31, %s33, %s24
      %p35 = scmp.ge.s32.totalorder %s34, 2
      %s36 = scalar_select %p35, 0, %s34
      %s37 = ssub.s32 %s24, %s36
      %s38 = ssub.s32 %s25, %s32
      %s39 = sor.u32 %s37, %s38
      %p40 = scmp.eq.s32.totalorder %s39, 0
      %s42 = sadd.s32 %s41, 1
      %s43 = scalar_select %p40, %s41, %s42
      %p46 = pneg %p40
      %p47 = scmp.eq.s32.totalorder %s17, 1
      %p48 = por %p46, %p47
      %p49 = scmp.ne.s32.totalorder %s41, %s44
      %p50 = scmp.eq.s32.totalorder %s17, 0
      %p51 = por %p49, %p50
      %p52 = scmp.ne.s32.totalorder %s41, %s44
      %p53 = scmp.eq.s32.totalorder %s22, 1
      %p54 = por %p52, %p53
      %p55 = scmp.ne.s32.totalorder %s44, %s45
      %p56 = scmp.eq.s32.totalorder %s22, 0
      %p57 = por %p55, %p56
      %p58 = scmp.ne.s32.totalorder %s44, %s45
      %p59 = scmp.eq.s32.totalorder %s23, 1
      %p60 = por %p58, %p59
      %p62 = scmp.ne.s32.totalorder %s45, %s61
      %p63 = scmp.eq.s32.totalorder %s23, 0
      %p64 = por %p62, %p63
      %s66 = sadd.s32 %s65, 1
      %p69 = scmp.eq.s32.totalorder %s17, 1
      %p70 = scmp.ne.s32.totalorder %s65, %s67
      %p71 = scmp.eq.s32.totalorder %s17, 0
      %p72 = por %p70, %p71
      %p73 = scmp.ne.s32.totalorder %s65, %s67
      %p74 = scmp.eq.s32.totalorder %s22, 1
      %p75 = por %p73, %p74
      %p76 = scmp.ne.s32.totalorder %s67, %s68
      %p77 = scmp.eq.s32.totalorder %s22, 0
      %p78 = por %p76, %p77
      %p79 = scmp.ne.s32.totalorder %s67, %s68
      %p80 = scmp.eq.s32.totalorder %s23, 1
      %p81 = por %p79, %p80
      %p83 = scmp.ne.s32.totalorder %s68, %s82
      %p84 = scmp.eq.s32.totalorder %s23, 0
      %p85 = por %p83, %p84
      %s87 = sadd.s32 %s86, 1
      %p90 = scmp.eq.s32.totalorder %s17, 1
      %p91 = scmp.ne.s32.totalorder %s86, %s88
      %p92 = scmp.eq.s32.totalorder %s17, 0
      %p93 = por %p91, %p92
      %p94 = scmp.ne.s32.totalorder %s86, %s88
      %p95 = scmp.eq.s32.totalorder %s22, 1
      %p96 = por %p94, %p95
      %p97 = scmp.ne.s32.totalorder %s88, %s89
      %p98 = scmp.eq.s32.totalorder %s22, 0
      %p99 = por %p97, %p98
      %p100 = scmp.ne.s32.totalorder %s88, %s89
      %p101 = scmp.eq.s32.totalorder %s23, 1
      %p102 = por %p100, %p101
      %p104 = scmp.ne.s32.totalorder %s89, %s103
      %p105 = scmp.eq.s32.totalorder %s23, 0
      %p106 = por %p104, %p105
      %s108 = sadd.s32 %s107, 1
      %p111 = scmp.eq.s32.totalorder %s17, 1
      %p112 = scmp.ne.s32.totalorder %s107, %s109
      %p113 = scmp.eq.s32.totalorder %s17, 0
      %p114 = por %p112, %p113
      %p115 = scmp.ne.s32.totalorder %s107, %s109
      %p116 = scmp.eq.s32.totalorder %s22, 1
      %p117 = por %p115, %p116
      %p118 = scmp.ne.s32.totalorder %s109, %s110
      %p119 = scmp.eq.s32.totalorder %s22, 0
      %p120 = por %p118, %p119
      %p121 = scmp.ne.s32.totalorder %s109, %s110
      %p122 = scmp.eq.s32.totalorder %s23, 1
      %p123 = por %p121, %p122
      %p125 = scmp.ne.s32.totalorder %s110, %s124
      %p126 = scmp.eq.s32.totalorder %s23, 0
      %p127 = por %p125, %p126
      %s129 = sadd.s32 %s128, 1
      %p132 = scmp.eq.s32.totalorder %s17, 1
      %p133 = scmp.ne.s32.totalorder %s128, %s130
      %p134 = scmp.eq.s32.totalorder %s17, 0
      %p135 = por %p133, %p134
      %p136 = scmp.ne.s32.totalorder %s128, %s130
      %p137 = scmp.eq.s32.totalorder %s22, 1
      %p138 = por %p136, %p137
      %p139 = scmp.ne.s32.totalorder %s130, %s131
      %p140 = scmp.eq.s32.totalorder %s22, 0
      %p141 = por %p139, %p140
      %p142 = scmp.ne.s32.totalorder %s130, %s131
      %p143 = scmp.eq.s32.totalorder %s23, 1
      %p144 = por %p142, %p143
      %p146 = scmp.ne.s32.totalorder %s131, %s145
      %p147 = scmp.eq.s32.totalorder %s23, 0
      %p148 = por %p146, %p147
      %s149 = ssub.s32 %s24, %s36
      %s150 = ssub.s32 %s25, %s32
      %s151 = sor.u32 %s149, %s150
      %p152 = scmp.eq.s32.totalorder %s151, 0
      %s154 = sadd.s32 %s153, 1
      %s155 = scalar_select %p152, %s153, %s154
      %p158 = pneg %p152
      %p159 = scmp.eq.s32.totalorder %s17, 1
      %p160 = por %p158, %p159
      %p161 = scmp.ne.s32.totalorder %s153, %s156
      %p162 = scmp.eq.s32.totalorder %s17, 0
      %p163 = por %p161, %p162
      %p164 = scmp.ne.s32.totalorder %s153, %s156
      %p165 = scmp.eq.s32.totalorder %s22, 1
      %p166 = por %p164, %p165
      %p167 = scmp.ne.s32.totalorder %s156, %s157
      %p168 = scmp.eq.s32.totalorder %s22, 0
      %p169 = por %p167, %p168
      %p170 = scmp.ne.s32.totalorder %s156, %s157
      %p171 = scmp.eq.s32.totalorder %s23, 1
      %p172 = por %p170, %p171
      %p174 = scmp.ne.s32.totalorder %s157, %s173
      %p175 = scmp.eq.s32.totalorder %s23, 0
      %p176 = por %p174, %p175
      %p177 = scmp.le.s32.totalorder 1, %s17
      %p178 = scmp.lt.s32.totalorder %s17, 3
      %p179 = pnand %p177, %p178
      %p180 = pneg %p179
      // Predicated region
      $region9: #{tpu_custom_call.1} parent=5 // pred_check
        _
      $region10: #{tpu_custom_call.1} parent=5 // pred_check_branch
        %182 = sbr.rel (%p179) target = $region12
      $region11: #{tpu_custom_call.1} parent=5 // pred_region
        %s183 = ssub.s32 %s17, 1
        // Predicated region
        $region13: #{tpu_custom_call.1} parent=11 // pred_check
          %p184 = pneg %p78
        $region14: #{tpu_custom_call.1} parent=11 // pred_check_branch
          %186 = sbr.rel (%p184) target = $region16
        $region15: #{tpu_custom_call.1} parent=11 // pred_region
          _
        $region16: #{tpu_custom_call.1} parent=11 // pred_fallthru
          _
        // Predicated region
        $region17: #{tpu_custom_call.1} parent=11 // pred_check
          %p187 = pneg %p99
        $region18: #{tpu_custom_call.1} parent=11 // pred_check_branch
          %189 = sbr.rel (%p187) target = $region20
        $region19: #{tpu_custom_call.1} parent=11 // pred_region
          _
        $region20: #{tpu_custom_call.1} parent=11 // pred_fallthru
          _
        // Predicated region
        $region21: #{tpu_custom_call.1} parent=11 // pred_check
          %p190 = pneg %p120
        $region22: #{tpu_custom_call.1} parent=11 // pred_check_branch
          %192 = sbr.rel (%p190) target = $region24
        $region23: #{tpu_custom_call.1} parent=11 // pred_region
          _
        $region24: #{tpu_custom_call.1} parent=11 // pred_fallthru
          _
        // Predicated region
        $region25: #{tpu_custom_call.1} parent=11 // pred_check
          %p193 = pneg %p141
        $region26: #{tpu_custom_call.1} parent=11 // pred_check_branch
          %195 = sbr.rel (%p193) target = $region28
        $region27: #{tpu_custom_call.1} parent=11 // pred_region
          _
        $region28: #{tpu_custom_call.1} parent=11 // pred_fallthru
          _
      $region12: #{tpu_custom_call.1} parent=5 // pred_fallthru
        _
      %p196 = scmp.lt.s32.totalorder %s17, 2
      // Predicated region
      $region29: #{tpu_custom_call.1} parent=5 // pred_check
        %p197 = pneg %p196
      $region30: #{tpu_custom_call.1} parent=5 // pred_check_branch
        %199 = sbr.rel (%p197) target = $region32
      $region31: #{tpu_custom_call.1} parent=5 // pred_region
        // Predicated region
        $region33: #{tpu_custom_call.1} parent=31 // pred_check
          %p200 = pneg %p51
        $region34: #{tpu_custom_call.1} parent=31 // pred_check_branch
          %202 = sbr.rel (%p200) target = $region36
        $region35: #{tpu_custom_call.1} parent=31 // pred_region
          %s203 = sand.u32 %s41, 1
          %s204 = scalar_lea.sflag [#allocation3], %s203
          %s205 = sand.u32 %s41, 1
          %s206 = smul.addr %s205, 128
          %s207 = scalar_lea.vmem [#allocation2], %s206
          %s208 = smul.u32 4, %s25
          %s210 = ssub.s32 2048, 2048
          %211 = vsyncadd %s204, %s210
          %s212 = smul.addr %s24, 16
          %s213 = sadd.s32 %s208, %s212
          %s214 = smul.addr %s213, 128
          %s215 = scalar_lea.hbm %s0, %s214
          %s216 = sshll.u32 %s207, 4
          %s217 = int_to_ptr.vmem [resolvable:$true] %s216
          %222 = dma.hbm_to_vmem [thread:$0]  %s215, 2048, %s217, %s204, 512, 512, 32
        $region36: #{tpu_custom_call.1} parent=31 // pred_fallthru
          _
      $region32: #{tpu_custom_call.1} parent=5 // pred_fallthru
        _
      %p223 = scmp.le.s32.totalorder 1, %s17
      %p224 = scmp.lt.s32.totalorder %s17, 3
      %p225 = pnand %p223, %p224
      %p226 = pneg %p225
      // Predicated region
      $region37: #{tpu_custom_call.1} parent=5 // pred_check
        _
      $region38: #{tpu_custom_call.1} parent=5 // pred_check_branch
        %228 = sbr.rel (%p225) target = $region40
      $region39: #{tpu_custom_call.1} parent=5 // pred_region
        %s229 = ssub.s32 %s17, 1
        %s230 = sand.u32 %s44, 1
        %s231 = scalar_lea.sflag [#allocation3], %s230
        %s232 = sand.u32 %s44, 1
        %s233 = smul.addr %s232, 128
        %s234 = scalar_lea.vmem [#allocation2], %s233
        // Predicated region
        $region41: #{tpu_custom_call.1} parent=39 // pred_check
          %p235 = pneg %p57
        $region42: #{tpu_custom_call.1} parent=39 // pred_check_branch
          %237 = sbr.rel (%p235) target = $region44
        $region43: #{tpu_custom_call.1} parent=39 // pred_region
          %238 = dma.done %s231, 2048
        $region44: #{tpu_custom_call.1} parent=39 // pred_fallthru
          _
        %s239 = sand.u32 %s44, 1
        %s240 = scalar_lea.sflag [#allocation3], %s239
        %s241 = sand.u32 %s44, 1
        %s242 = smul.addr %s241, 128
        %s243 = scalar_lea.vmem [#allocation2], %s242
        %p244 = pneg %p57
        %p245 = pneg %p54
        %p246 = pneg %p78
        %p247 = pneg %p75
        %p248 = pneg %p99
        %p249 = pneg %p96
        %p250 = pneg %p120
        %p251 = pneg %p117
        %p252 = pneg %p141
        %p253 = pneg %p138
        %p254 = pneg %p169
        %p255 = pneg %p166
        %s256 = sand.u32 %s156, 1
        %s257 = scalar_lea.sflag [#allocation4], %s256
        %s258 = sand.u32 %s156, 1
        %s259 = smul.addr %s258, 16
        %s260 = scalar_lea.vmem [#allocation5], %s259
        %s261 = smul.u32 4, %s27
        %s262 = smul.u32 4, %s27
        %v263 = vld [vmem:[%s1] sm:$0xff]
        %v264 = vld [vmem:[%s2] sm:$0xff]
        %v265 = vld [vmem:[%s234] sm:$0xff]
        %v266 = vld [vmem:[%s234 + $0x8] sm:$0xff]
        %v267 = vld [vmem:[%s234 + $0x10] sm:$0xff]
        %v268 = vld [vmem:[%s234 + $0x18] sm:$0xff]
        %v269 = vmax.f32 %v265, 0.0
        %v270 = vmax.f32 %v266, 0.0
        %v271 = vmax.f32 %v267, 0.0
        %v272 = vmax.f32 %v268, 0.0
        %274 = vset.pattern.permute.xlu0 0
        %275 = vperm.xlu0 %274, %v264
        %v276 = vpop.permute.xlu0 %275
        %vm278 = vcmask 64512
        %v280 = vsel %vm278, %v263, 0
        %282 = vmatprep.subr.mxu0 %v270
        %283 = vmatpush1.msra.mxu0 %v269
        %284 = vmatprep.subr.mxu0 0.0
        %285 = vmatpush1.msra.mxu0 0.0
        %286 = vmatprep.subr.mxu0 0.0
        %287 = vmatpush1.msra.mxu0 0.0
        %288 = vmatprep.subr.mxu0 0.0
        %289 = vmatpush1.msra.mxu0 0.0
        %290 = vmatprep.subr.mxu0 0.0
        %291 = vmatpush1.msra.mxu0 0.0
        %292 = vmatprep.subr.mxu0 0.0
        %293 = vmatpush1.msra.mxu0 0.0
        %294 = vmatprep.subr.mxu0 0.0
        %295 = vmatpush1.msra.mxu0 0.0
        %296 = vmatprep.subr.mxu0 0.0
        %297 = vmatpush1.msra.mxu0 0.0
        %298 = vmatprep.subr.mxu0 0.0
        %299 = vmatpush1.msra.mxu0 0.0
        %300 = vmatprep.subr.mxu0 0.0
        %301 = vmatpush1.msra.mxu0 0.0
        %302 = vmatprep.subr.mxu0 0.0
        %303 = vmatpush1.msra.mxu0 0.0
        %304 = vmatprep.subr.mxu0 0.0
        %305 = vmatpush1.msra.mxu0 0.0
        %306 = vmatprep.subr.mxu0 0.0
        %307 = vmatpush1.msra.mxu0 0.0
        %308 = vmatprep.subr.mxu0 0.0
        %309 = vmatpush1.msra.mxu0 0.0
        %310 = vmatprep.subr.mxu0 0.0
        %311 = vmatpush1.msra.mxu0 0.0
        %312 = vmatprep.subr.mxu0 0.0
        %313 = vmatpush1.msra.mxu0 0.0
        %314 = vmatprep.subr.mxu0 0.0
        %315 = vmatpush1.msra.mxu0 0.0
        %316 = vmatprep.subr.mxu0 0.0
        %317 = vmatpush1.msra.mxu0 0.0
        %318 = vmatprep.subr.mxu0 0.0
        %319 = vmatpush1.msra.mxu0 0.0
        %320 = vmatprep.subr.mxu0 0.0
        %321 = vmatpush1.msra.mxu0 0.0
        %322 = vmatprep.subr.mxu0 0.0
        %323 = vmatpush1.msra.mxu0 0.0
        %324 = vmatprep.subr.mxu0 0.0
        %325 = vmatpush1.msra.mxu0 0.0
        %326 = vmatprep.subr.mxu0 0.0
        %327 = vmatpush1.msra.mxu0 0.0
        %328 = vmatprep.subr.mxu0 0.0
        %329 = vmatpush1.msra.mxu0 0.0
        %330 = vmatprep.subr.mxu0 0.0
        %331 = vmatpush1.msra.mxu0 0.0
        %332 = vmatprep.subr.mxu0 0.0
        %333 = vmatpush1.msra.mxu0 0.0
        %334 = vmatprep.subr.mxu0 0.0
        %335 = vmatpush1.msra.mxu0 0.0
        %336 = vmatprep.subr.mxu0 0.0
        %337 = vmatpush1.msra.mxu0 0.0
        %338 = vmatprep.subr.mxu0 0.0
        %339 = vmatpush1.msra.mxu0 0.0
        %340 = vmatprep.subr.mxu0 0.0
        %341 = vmatpush1.msra.mxu0 0.0
        %342 = vmatprep.subr.mxu0 0.0
        %343 = vmatpush1.msra.mxu0 0.0
        %344 = vmatprep.subr.mxu0 0.0
        %345 = vmatpush1.msra.mxu0 0.0
        %346 = vmatprep.mubr.f32.mxu0 0.0
        %347 = vmatmul.mubr.f32.gmra.mrb[0].mxu0 %v280
        %v348 = vpop.f32.mrb[0].mxu0
        %v349 = vadd.f32 %v276, %v348
        %v350 = vpop.f32.mrb[0].mxu0
        %v351 = vadd.f32 %v276, %v350
        %352 = vdwg.mxu0
        %353 = vmatprep.subr.mxu0 %v272
        %354 = vmatpush1.msra.mxu0 %v271
        %355 = vmatprep.subr.mxu0 0.0
        %356 = vmatpush1.msra.mxu0 0.0
        %357 = vmatprep.subr.mxu0 0.0
        %358 = vmatpush1.msra.mxu0 0.0
        %359 = vmatprep.subr.mxu0 0.0
        %360 = vmatpush1.msra.mxu0 0.0
        %361 = vmatprep.subr.mxu0 0.0
        %362 = vmatpush1.msra.mxu0 0.0
        %363 = vmatprep.subr.mxu0 0.0
        %364 = vmatpush1.msra.mxu0 0.0
        %365 = vmatprep.subr.mxu0 0.0
        %366 = vmatpush1.msra.mxu0 0.0
        %367 = vmatprep.subr.mxu0 0.0
        %368 = vmatpush1.msra.mxu0 0.0
        %369 = vmatprep.subr.mxu0 0.0
        %370 = vmatpush1.msra.mxu0 0.0
        %371 = vmatprep.subr.mxu0 0.0
        %372 = vmatpush1.msra.mxu0 0.0
        %373 = vmatprep.subr.mxu0 0.0
        %374 = vmatpush1.msra.mxu0 0.0
        %375 = vmatprep.subr.mxu0 0.0
        %376 = vmatpush1.msra.mxu0 0.0
        %377 = vmatprep.subr.mxu0 0.0
        %378 = vmatpush1.msra.mxu0 0.0
        %379 = vmatprep.subr.mxu0 0.0
        %380 = vmatpush1.msra.mxu0 0.0
        %381 = vmatprep.subr.mxu0 0.0
        %382 = vmatpush1.msra.mxu0 0.0
        %383 = vmatprep.subr.mxu0 0.0
        %384 = vmatpush1.msra.mxu0 0.0
        %385 = vmatprep.subr.mxu0 0.0
        %386 = vmatpush1.msra.mxu0 0.0
        %387 = vmatprep.subr.mxu0 0.0
        %388 = vmatpush1.msra.mxu0 0.0
        %389 = vmatprep.subr.mxu0 0.0
        %390 = vmatpush1.msra.mxu0 0.0
        %391 = vmatprep.subr.mxu0 0.0
        %392 = vmatpush1.msra.mxu0 0.0
        %393 = vmatprep.subr.mxu0 0.0
        %394 = vmatpush1.msra.mxu0 0.0
        %395 = vmatprep.subr.mxu0 0.0
        %396 = vmatpush1.msra.mxu0 0.0
        %397 = vmatprep.subr.mxu0 0.0
        %398 = vmatpush1.msra.mxu0 0.0
        %399 = vmatprep.subr.mxu0 0.0
        %400 = vmatpush1.msra.mxu0 0.0
        %401 = vmatprep.subr.mxu0 0.0
        %402 = vmatpush1.msra.mxu0 0.0
        %403 = vmatprep.subr.mxu0 0.0
        %404 = vmatpush1.msra.mxu0 0.0
        %405 = vmatprep.subr.mxu0 0.0
        %406 = vmatpush1.msra.mxu0 0.0
        %407 = vmatprep.subr.mxu0 0.0
        %408 = vmatpush1.msra.mxu0 0.0
        %409 = vmatprep.subr.mxu0 0.0
        %410 = vmatpush1.msra.mxu0 0.0
        %411 = vmatprep.subr.mxu0 0.0
        %412 = vmatpush1.msra.mxu0 0.0
        %413 = vmatprep.subr.mxu0 0.0
        %414 = vmatpush1.msra.mxu0 0.0
        %415 = vmatprep.subr.mxu0 0.0
        %416 = vmatpush1.msra.mxu0 0.0
        %417 = vmatprep.mubr.f32.mxu0 0.0
        %418 = vmatmul.mubr.f32.gmra.mrb[0].mxu0 %v280
        %v419 = vpop.f32.mrb[0].mxu0
        %v420 = vadd.f32 %v276, %v419
        %v421 = vpop.f32.mrb[0].mxu0
        %v422 = vadd.f32 %v276, %v421
        %423 = vdwg.mxu0
        %v424 = vmax.f32 %v349, 0.0
        %v425 = vmax.f32 %v351, 0.0
        %v426 = vmax.f32 %v420, 0.0
        %v427 = vmax.f32 %v422, 0.0
        %v428 = vld [vmem:[%s3] sm:$0xf]
        %s429 = scalar_lea.vmem %s234, 32 [#allocation2]
        %v430 = vld [vmem:[%s429] sm:$0xff]
        %v431 = vld [vmem:[%s429 + $0x8] sm:$0xff]
        %v432 = vld [vmem:[%s429 + $0x10] sm:$0xff]
        %v433 = vld [vmem:[%s429 + $0x18] sm:$0xff]
        %v434 = vmax.f32 %v430, 0.0
        %v435 = vmax.f32 %v431, 0.0
        %v436 = vmax.f32 %v432, 0.0
        %v437 = vmax.f32 %v433, 0.0
        %438 = vmatprep.subr.mxu0 %v435
        %439 = vmatpush1.msra.mxu0 %v434
        %440 = vmatprep.subr.mxu0 0.0
        %441 = vmatpush1.msra.mxu0 0.0
        %442 = vmatprep.subr.mxu0 0.0
        %443 = vmatpush1.msra.mxu0 0.0
        %444 = vmatprep.subr.mxu0 0.0
        %445 = vmatpush1.msra.mxu0 0.0
        %446 = vmatprep.subr.mxu0 0.0
        %447 = vmatpush1.msra.mxu0 0.0
        %448 = vmatprep.subr.mxu0 0.0
        %449 = vmatpush1.msra.mxu0 0.0
        %450 = vmatprep.subr.mxu0 0.0
        %451 = vmatpush1.msra.mxu0 0.0
        %452 = vmatprep.subr.mxu0 0.0
        %453 = vmatpush1.msra.mxu0 0.0
        %454 = vmatprep.subr.mxu0 0.0
        %455 = vmatpush1.msra.mxu0 0.0
        %456 = vmatprep.subr.mxu0 0.0
        %457 = vmatpush1.msra.mxu0 0.0
        %458 = vmatprep.subr.mxu0 0.0
        %459 = vmatpush1.msra.mxu0 0.0
        %460 = vmatprep.subr.mxu0 0.0
        %461 = vmatpush1.msra.mxu0 0.0
        %462 = vmatprep.subr.mxu0 0.0
        %463 = vmatpush1.msra.mxu0 0.0
        %464 = vmatprep.subr.mxu0 0.0
        %465 = vmatpush1.msra.mxu0 0.0
        %466 = vmatprep.subr.mxu0 0.0
        %467 = vmatpush1.msra.mxu0 0.0
        %468 = vmatprep.subr.mxu0 0.0
        %469 = vmatpush1.msra.mxu0 0.0
        %470 = vmatprep.subr.mxu0 0.0
        %471 = vmatpush1.msra.mxu0 0.0
        %472 = vmatprep.subr.mxu0 0.0
        %473 = vmatpush1.msra.mxu0 0.0
        %474 = vmatprep.subr.mxu0 0.0
        %475 = vmatpush1.msra.mxu0 0.0
        %476 = vmatprep.subr.mxu0 0.0
        %477 = vmatpush1.msra.mxu0 0.0
        %478 = vmatprep.subr.mxu0 0.0
        %479 = vmatpush1.msra.mxu0 0.0
        %480 = vmatprep.subr.mxu0 0.0
        %481 = vmatpush1.msra.mxu0 0.0
        %482 = vmatprep.subr.mxu0 0.0
        %483 = vmatpush1.msra.mxu0 0.0
        %484 = vmatprep.subr.mxu0 0.0
        %485 = vmatpush1.msra.mxu0 0.0
        %486 = vmatprep.subr.mxu0 0.0
        %487 = vmatpush1.msra.mxu0 0.0
        %488 = vmatprep.subr.mxu0 0.0
        %489 = vmatpush1.msra.mxu0 0.0
        %490 = vmatprep.subr.mxu0 0.0
        %491 = vmatpush1.msra.mxu0 0.0
        %492 = vmatprep.subr.mxu0 0.0
        %493 = vmatpush1.msra.mxu0 0.0
        %494 = vmatprep.subr.mxu0 0.0
        %495 = vmatpush1.msra.mxu0 0.0
        %496 = vmatprep.subr.mxu0 0.0
        %497 = vmatpush1.msra.mxu0 0.0
        %498 = vmatprep.subr.mxu0 0.0
        %499 = vmatpush1.msra.mxu0 0.0
        %500 = vmatprep.subr.mxu0 0.0
        %501 = vmatpush1.msra.mxu0 0.0
        %502 = vmatprep.mubr.f32.mxu0 0.0
        %503 = vmatmul.mubr.f32.gmra.mrb[0].mxu0 %v280
        %v504 = vpop.f32.mrb[0].mxu0
        %v505 = vadd.f32 %v276, %v504
        %v506 = vpop.f32.mrb[0].mxu0
        %v507 = vadd.f32 %v276, %v506
        %508 = vdwg.mxu0
        %509 = vmatprep.subr.mxu0 %v437
        %510 = vmatpush1.msra.mxu0 %v436
        %511 = vmatprep.subr.mxu0 0.0
        %512 = vmatpush1.msra.mxu0 0.0
        %513 = vmatprep.subr.mxu0 0.0
        %514 = vmatpush1.msra.mxu0 0.0
        %515 = vmatprep.subr.mxu0 0.0
        %516 = vmatpush1.msra.mxu0 0.0
        %517 = vmatprep.subr.mxu0 0.0
        %518 = vmatpush1.msra.mxu0 0.0
        %519 = vmatprep.subr.mxu0 0.0
        %520 = vmatpush1.msra.mxu0 0.0
        %521 = vmatprep.subr.mxu0 0.0
        %522 = vmatpush1.msra.mxu0 0.0
        %523 = vmatprep.subr.mxu0 0.0
        %524 = vmatpush1.msra.mxu0 0.0
        %525 = vmatprep.subr.mxu0 0.0
        %526 = vmatpush1.msra.mxu0 0.0
        %527 = vmatprep.subr.mxu0 0.0
        %528 = vmatpush1.msra.mxu0 0.0
        %529 = vmatprep.subr.mxu0 0.0
        %530 = vmatpush1.msra.mxu0 0.0
        %531 = vmatprep.subr.mxu0 0.0
        %532 = vmatpush1.msra.mxu0 0.0
        %533 = vmatprep.subr.mxu0 0.0
        %534 = vmatpush1.msra.mxu0 0.0
        %535 = vmatprep.subr.mxu0 0.0
        %536 = vmatpush1.msra.mxu0 0.0
        %537 = vmatprep.subr.mxu0 0.0
        %538 = vmatpush1.msra.mxu0 0.0
        %539 = vmatprep.subr.mxu0 0.0
        %540 = vmatpush1.msra.mxu0 0.0
        %541 = vmatprep.subr.mxu0 0.0
        %542 = vmatpush1.msra.mxu0 0.0
        %543 = vmatprep.subr.mxu0 0.0
        %544 = vmatpush1.msra.mxu0 0.0
        %545 = vmatprep.subr.mxu0 0.0
        %546 = vmatpush1.msra.mxu0 0.0
        %547 = vmatprep.subr.mxu0 0.0
        %548 = vmatpush1.msra.mxu0 0.0
        %549 = vmatprep.subr.mxu0 0.0
        %550 = vmatpush1.msra.mxu0 0.0
        %551 = vmatprep.subr.mxu0 0.0
        %552 = vmatpush1.msra.mxu0 0.0
        %553 = vmatprep.subr.mxu0 0.0
        %554 = vmatpush1.msra.mxu0 0.0
        %555 = vmatprep.subr.mxu0 0.0
        %556 = vmatpush1.msra.mxu0 0.0
        %557 = vmatprep.subr.mxu0 0.0
        %558 = vmatpush1.msra.mxu0 0.0
        %559 = vmatprep.subr.mxu0 0.0
        %560 = vmatpush1.msra.mxu0 0.0
        %561 = vmatprep.subr.mxu0 0.0
        %562 = vmatpush1.msra.mxu0 0.0
        %563 = vmatprep.subr.mxu0 0.0
        %564 = vmatpush1.msra.mxu0 0.0
        %565 = vmatprep.subr.mxu0 0.0
        %566 = vmatpush1.msra.mxu0 0.0
        %567 = vmatprep.subr.mxu0 0.0
        %568 = vmatpush1.msra.mxu0 0.0
        %569 = vmatprep.subr.mxu0 0.0
        %570 = vmatpush1.msra.mxu0 0.0
        %571 = vmatprep.subr.mxu0 0.0
        %572 = vmatpush1.msra.mxu0 0.0
        %573 = vmatprep.mubr.f32.mxu0 0.0
        %574 = vmatmul.mubr.f32.gmra.mrb[0].mxu0 %v280
        %v575 = vpop.f32.mrb[0].mxu0
        %v576 = vadd.f32 %v276, %v575
        %v577 = vpop.f32.mrb[0].mxu0
        %v578 = vadd.f32 %v276, %v577
        %579 = vdwg.mxu0
        %v580 = vmax.f32 %v505, 0.0
        %v581 = vmax.f32 %v507, 0.0
        %v582 = vmax.f32 %v576, 0.0
        %v583 = vmax.f32 %v578, 0.0
        %s584 = scalar_lea.vmem %s3, 4
        %v585 = vld [vmem:[%s584] sm:$0xf]
        %v587 = vsel %vm278, %v585, 0
        %589 = vmatprep.subr.mxu0 %v581
        %590 = vmatpush1.msra.mxu0 %v580
        %591 = vmatprep.subr.mxu0 0.0
        %592 = vmatpush1.msra.mxu0 0.0
        %593 = vmatprep.subr.mxu0 0.0
        %594 = vmatpush1.msra.mxu0 0.0
        %595 = vmatprep.subr.mxu0 0.0
        %596 = vmatpush1.msra.mxu0 0.0
        %597 = vmatprep.subr.mxu0 0.0
        %598 = vmatpush1.msra.mxu0 0.0
        %599 = vmatprep.subr.mxu0 0.0
        %600 = vmatpush1.msra.mxu0 0.0
        %601 = vmatprep.subr.mxu0 0.0
        %602 = vmatpush1.msra.mxu0 0.0
        %603 = vmatprep.subr.mxu0 0.0
        %604 = vmatpush1.msra.mxu0 0.0
        %605 = vmatprep.subr.mxu0 0.0
        %606 = vmatpush1.msra.mxu0 0.0
        %607 = vmatprep.subr.mxu0 0.0
        %608 = vmatpush1.msra.mxu0 0.0
        %609 = vmatprep.subr.mxu0 0.0
        %610 = vmatpush1.msra.mxu0 0.0
        %611 = vmatprep.subr.mxu0 0.0
        %612 = vmatpush1.msra.mxu0 0.0
        %613 = vmatprep.subr.mxu0 0.0
        %614 = vmatpush1.msra.mxu0 0.0
        %615 = vmatprep.subr.mxu0 0.0
        %616 = vmatpush1.msra.mxu0 0.0
        %617 = vmatprep.subr.mxu0 0.0
        %618 = vmatpush1.msra.mxu0 0.0
        %619 = vmatprep.subr.mxu0 0.0
        %620 = vmatpush1.msra.mxu0 0.0
        %621 = vmatprep.subr.mxu0 0.0
        %622 = vmatpush1.msra.mxu0 0.0
        %623 = vmatprep.subr.mxu0 0.0
        %624 = vmatpush1.msra.mxu0 0.0
        %625 = vmatprep.subr.mxu0 0.0
        %626 = vmatpush1.msra.mxu0 0.0
        %627 = vmatprep.subr.mxu0 0.0
        %628 = vmatpush1.msra.mxu0 0.0
        %629 = vmatprep.subr.mxu0 0.0
        %630 = vmatpush1.msra.mxu0 0.0
        %631 = vmatprep.subr.mxu0 0.0
        %632 = vmatpush1.msra.mxu0 0.0
        %633 = vmatprep.subr.mxu0 0.0
        %634 = vmatpush1.msra.mxu0 0.0
        %635 = vmatprep.subr.mxu0 0.0
        %636 = vmatpush1.msra.mxu0 0.0
        %637 = vmatprep.subr.mxu0 0.0
        %638 = vmatpush1.msra.mxu0 0.0
        %639 = vmatprep.subr.mxu0 0.0
        %640 = vmatpush1.msra.mxu0 0.0
        %641 = vmatprep.subr.mxu0 0.0
        %642 = vmatpush1.msra.mxu0 0.0
        %643 = vmatprep.subr.mxu0 0.0
        %644 = vmatpush1.msra.mxu0 0.0
        %645 = vmatprep.subr.mxu0 0.0
        %646 = vmatpush1.msra.mxu0 0.0
        %647 = vmatprep.subr.mxu0 0.0
        %648 = vmatpush1.msra.mxu0 0.0
        %649 = vmatprep.subr.mxu0 0.0
        %650 = vmatpush1.msra.mxu0 0.0
        %651 = vmatprep.subr.mxu0 0.0
        %652 = vmatpush1.msra.mxu0 0.0
        %653 = vmatprep.mubr.f32.mxu0 0.0
        %654 = vmatmul.mubr.f32.gmra.mrb[0].mxu0 %v587
        %v655 = vpop.f32.mrb[0].mxu0
        %v656 = vadd.f32 0.0, %v655
        %v657 = vpop.f32.mrb[0].mxu0
        %v658 = vadd.f32 0.0, %v657
        %659 = vdwg.mxu0
        %660 = vmatprep.subr.mxu0 %v583
        %661 = vmatpush1.msra.mxu0 %v582
        %662 = vmatprep.subr.mxu0 0.0
        %663 = vmatpush1.msra.mxu0 0.0
        %664 = vmatprep.subr.mxu0 0.0
        %665 = vmatpush1.msra.mxu0 0.0
        %666 = vmatprep.subr.mxu0 0.0
        %667 = vmatpush1.msra.mxu0 0.0
        %668 = vmatprep.subr.mxu0 0.0
        %669 = vmatpush1.msra.mxu0 0.0
        %670 = vmatprep.subr.mxu0 0.0
        %671 = vmatpush1.msra.mxu0 0.0
        %672 = vmatprep.subr.mxu0 0.0
        %673 = vmatpush1.msra.mxu0 0.0
        %674 = vmatprep.subr.mxu0 0.0
        %675 = vmatpush1.msra.mxu0 0.0
        %676 = vmatprep.subr.mxu0 0.0
        %677 = vmatpush1.msra.mxu0 0.0
        %678 = vmatprep.subr.mxu0 0.0
        %679 = vmatpush1.msra.mxu0 0.0
        %680 = vmatprep.subr.mxu0 0.0
        %681 = vmatpush1.msra.mxu0 0.0
        %682 = vmatprep.subr.mxu0 0.0
        %683 = vmatpush1.msra.mxu0 0.0
        %684 = vmatprep.subr.mxu0 0.0
        %685 = vmatpush1.msra.mxu0 0.0
        %686 = vmatprep.subr.mxu0 0.0
        %687 = vmatpush1.msra.mxu0 0.0
        %688 = vmatprep.subr.mxu0 0.0
        %689 = vmatpush1.msra.mxu0 0.0
        %690 = vmatprep.subr.mxu0 0.0
        %691 = vmatpush1.msra.mxu0 0.0
        %692 = vmatprep.subr.mxu0 0.0
        %693 = vmatpush1.msra.mxu0 0.0
        %694 = vmatprep.subr.mxu0 0.0
        %695 = vmatpush1.msra.mxu0 0.0
        %696 = vmatprep.subr.mxu0 0.0
        %697 = vmatpush1.msra.mxu0 0.0
        %698 = vmatprep.subr.mxu0 0.0
        %699 = vmatpush1.msra.mxu0 0.0
        %700 = vmatprep.subr.mxu0 0.0
        %701 = vmatpush1.msra.mxu0 0.0
        %702 = vmatprep.subr.mxu0 0.0
        %703 = vmatpush1.msra.mxu0 0.0
        %704 = vmatprep.subr.mxu0 0.0
        %705 = vmatpush1.msra.mxu0 0.0
        %706 = vmatprep.subr.mxu0 0.0
        %707 = vmatpush1.msra.mxu0 0.0
        %708 = vmatprep.subr.mxu0 0.0
        %709 = vmatpush1.msra.mxu0 0.0
        %710 = vmatprep.subr.mxu0 0.0
        %711 = vmatpush1.msra.mxu0 0.0
        %712 = vmatprep.subr.mxu0 0.0
        %713 = vmatpush1.msra.mxu0 0.0
        %714 = vmatprep.subr.mxu0 0.0
        %715 = vmatpush1.msra.mxu0 0.0
        %716 = vmatprep.subr.mxu0 0.0
        %717 = vmatpush1.msra.mxu0 0.0
        %718 = vmatprep.subr.mxu0 0.0
        %719 = vmatpush1.msra.mxu0 0.0
        %720 = vmatprep.subr.mxu0 0.0
        %721 = vmatpush1.msra.mxu0 0.0
        %722 = vmatprep.subr.mxu0 0.0
        %723 = vmatpush1.msra.mxu0 0.0
        %724 = vmatprep.mubr.f32.mxu0 0.0
        %725 = vmatmul.mubr.f32.gmra.mrb[0].mxu0 %v587
        %v726 = vpop.f32.mrb[0].mxu0
        %v727 = vadd.f32 0.0, %v726
        %v728 = vpop.f32.mrb[0].mxu0
        %v729 = vadd.f32 0.0, %v728
        %730 = vdwg.mxu0
        %v732 = vsel %vm278, %v428, 0
        %734 = vmatprep.subr.mxu0 %v425
        %735 = vmatpush1.msra.mxu0 %v424
        %736 = vmatprep.subr.mxu0 0.0
        %737 = vmatpush1.msra.mxu0 0.0
        %738 = vmatprep.subr.mxu0 0.0
        %739 = vmatpush1.msra.mxu0 0.0
        %740 = vmatprep.subr.mxu0 0.0
        %741 = vmatpush1.msra.mxu0 0.0
        %742 = vmatprep.subr.mxu0 0.0
        %743 = vmatpush1.msra.mxu0 0.0
        %744 = vmatprep.subr.mxu0 0.0
        %745 = vmatpush1.msra.mxu0 0.0
        %746 = vmatprep.subr.mxu0 0.0
        %747 = vmatpush1.msra.mxu0 0.0
        %748 = vmatprep.subr.mxu0 0.0
        %749 = vmatpush1.msra.mxu0 0.0
        %750 = vmatprep.subr.mxu0 0.0
        %751 = vmatpush1.msra.mxu0 0.0
        %752 = vmatprep.subr.mxu0 0.0
        %753 = vmatpush1.msra.mxu0 0.0
        %754 = vmatprep.subr.mxu0 0.0
        %755 = vmatpush1.msra.mxu0 0.0
        %756 = vmatprep.subr.mxu0 0.0
        %757 = vmatpush1.msra.mxu0 0.0
        %758 = vmatprep.subr.mxu0 0.0
        %759 = vmatpush1.msra.mxu0 0.0
        %760 = vmatprep.subr.mxu0 0.0
        %761 = vmatpush1.msra.mxu0 0.0
        %762 = vmatprep.subr.mxu0 0.0
        %763 = vmatpush1.msra.mxu0 0.0
        %764 = vmatprep.subr.mxu0 0.0
        %765 = vmatpush1.msra.mxu0 0.0
        %766 = vmatprep.subr.mxu0 0.0
        %767 = vmatpush1.msra.mxu0 0.0
        %768 = vmatprep.subr.mxu0 0.0
        %769 = vmatpush1.msra.mxu0 0.0
        %770 = vmatprep.subr.mxu0 0.0
        %771 = vmatpush1.msra.mxu0 0.0
        %772 = vmatprep.subr.mxu0 0.0
        %773 = vmatpush1.msra.mxu0 0.0
        %774 = vmatprep.subr.mxu0 0.0
        %775 = vmatpush1.msra.mxu0 0.0
        %776 = vmatprep.subr.mxu0 0.0
        %777 = vmatpush1.msra.mxu0 0.0
        %778 = vmatprep.subr.mxu0 0.0
        %779 = vmatpush1.msra.mxu0 0.0
        %780 = vmatprep.subr.mxu0 0.0
        %781 = vmatpush1.msra.mxu0 0.0
        %782 = vmatprep.subr.mxu0 0.0
        %783 = vmatpush1.msra.mxu0 0.0
        %784 = vmatprep.subr.mxu0 0.0
        %785 = vmatpush1.msra.mxu0 0.0
        %786 = vmatprep.subr.mxu0 0.0
        %787 = vmatpush1.msra.mxu0 0.0
        %788 = vmatprep.subr.mxu0 0.0
        %789 = vmatpush1.msra.mxu0 0.0
        %790 = vmatprep.subr.mxu0 0.0
        %791 = vmatpush1.msra.mxu0 0.0
        %792 = vmatprep.subr.mxu0 0.0
        %793 = vmatpush1.msra.mxu0 0.0
        %794 = vmatprep.subr.mxu0 0.0
        %795 = vmatpush1.msra.mxu0 0.0
        %796 = vmatprep.subr.mxu0 0.0
        %797 = vmatpush1.msra.mxu0 0.0
        %798 = vmatprep.mubr.f32.mxu0 0.0
        %799 = vmatmul.mubr.f32.gmra.mrb[0].mxu0 %v732
        %v800 = vpop.f32.mrb[0].mxu0
        %v801 = vadd.f32 %v656, %v800
        %v802 = vpop.f32.mrb[0].mxu0
        %v803 = vadd.f32 %v658, %v802
        %804 = vdwg.mxu0
        %805 = vmatprep.subr.mxu0 %v427
        %806 = vmatpush1.msra.mxu0 %v426
        %807 = vmatprep.subr.mxu0 0.0
        %808 = vmatpush1.msra.mxu0 0.0
        %809 = vmatprep.subr.mxu0 0.0
        %810 = vmatpush1.msra.mxu0 0.0
        %811 = vmatprep.subr.mxu0 0.0
        %812 = vmatpush1.msra.mxu0 0.0
        %813 = vmatprep.subr.mxu0 0.0
        %814 = vmatpush1.msra.mxu0 0.0
        %815 = vmatprep.subr.mxu0 0.0
        %816 = vmatpush1.msra.mxu0 0.0
        %817 = vmatprep.subr.mxu0 0.0
        %818 = vmatpush1.msra.mxu0 0.0
        %819 = vmatprep.subr.mxu0 0.0
        %820 = vmatpush1.msra.mxu0 0.0
        %821 = vmatprep.subr.mxu0 0.0
        %822 = vmatpush1.msra.mxu0 0.0
        %823 = vmatprep.subr.mxu0 0.0
        %824 = vmatpush1.msra.mxu0 0.0
        %825 = vmatprep.subr.mxu0 0.0
        %826 = vmatpush1.msra.mxu0 0.0
        %827 = vmatprep.subr.mxu0 0.0
        %828 = vmatpush1.msra.mxu0 0.0
        %829 = vmatprep.subr.mxu0 0.0
        %830 = vmatpush1.msra.mxu0 0.0
        %831 = vmatprep.subr.mxu0 0.0
        %832 = vmatpush1.msra.mxu0 0.0
        %833 = vmatprep.subr.mxu0 0.0
        %834 = vmatpush1.msra.mxu0 0.0
        %835 = vmatprep.subr.mxu0 0.0
        %836 = vmatpush1.msra.mxu0 0.0
        %837 = vmatprep.subr.mxu0 0.0
        %838 = vmatpush1.msra.mxu0 0.0
        %839 = vmatprep.subr.mxu0 0.0
        %840 = vmatpush1.msra.mxu0 0.0
        %841 = vmatprep.subr.mxu0 0.0
        %842 = vmatpush1.msra.mxu0 0.0
        %843 = vmatprep.subr.mxu0 0.0
        %844 = vmatpush1.msra.mxu0 0.0
        %845 = vmatprep.subr.mxu0 0.0
        %846 = vmatpush1.msra.mxu0 0.0
        %847 = vmatprep.subr.mxu0 0.0
        %848 = vmatpush1.msra.mxu0 0.0
        %849 = vmatprep.subr.mxu0 0.0
        %850 = vmatpush1.msra.mxu0 0.0
        %851 = vmatprep.subr.mxu0 0.0
        %852 = vmatpush1.msra.mxu0 0.0
        %853 = vmatprep.subr.mxu0 0.0
        %854 = vmatpush1.msra.mxu0 0.0
        %855 = vmatprep.subr.mxu0 0.0
        %856 = vmatpush1.msra.mxu0 0.0
        %857 = vmatprep.subr.mxu0 0.0
        %858 = vmatpush1.msra.mxu0 0.0
        %859 = vmatprep.subr.mxu0 0.0
        %860 = vmatpush1.msra.mxu0 0.0
        %861 = vmatprep.subr.mxu0 0.0
        %862 = vmatpush1.msra.mxu0 0.0
        %863 = vmatprep.subr.mxu0 0.0
        %864 = vmatpush1.msra.mxu0 0.0
        %865 = vmatprep.subr.mxu0 0.0
        %866 = vmatpush1.msra.mxu0 0.0
        %867 = vmatprep.subr.mxu0 0.0
        %868 = vmatpush1.msra.mxu0 0.0
        %869 = vmatprep.mubr.f32.mxu0 0.0
        %870 = vmatmul.mubr.f32.gmra.mrb[0].mxu0 %v732
        %v871 = vpop.f32.mrb[0].mxu0
        %v872 = vadd.f32 %v727, %v871
        %v873 = vpop.f32.mrb[0].mxu0
        %v874 = vadd.f32 %v729, %v873
        %875 = vdwg.mxu0
        %s876 = scalar_lea.vmem %s234, 64 [#allocation2]
        %v877 = vld [vmem:[%s876] sm:$0xff]
        %v878 = vld [vmem:[%s876 + $0x8] sm:$0xff]
        %v879 = vld [vmem:[%s876 + $0x10] sm:$0xff]
        %v880 = vld [vmem:[%s876 + $0x18] sm:$0xff]
        %v881 = vmax.f32 %v877, 0.0
        %v882 = vmax.f32 %v878, 0.0
        %v883 = vmax.f32 %v879, 0.0
        %v884 = vmax.f32 %v880, 0.0
        %885 = vmatprep.subr.mxu0 %v882
        %886 = vmatpush1.msra.mxu0 %v881
        %887 = vmatprep.subr.mxu0 0.0
        %888 = vmatpush1.msra.mxu0 0.0
        %889 = vmatprep.subr.mxu0 0.0
        %890 = vmatpush1.msra.mxu0 0.0
        %891 = vmatprep.subr.mxu0 0.0
        %892 = vmatpush1.msra.mxu0 0.0
        %893 = vmatprep.subr.mxu0 0.0
        %894 = vmatpush1.msra.mxu0 0.0
        %895 = vmatprep.subr.mxu0 0.0
        %896 = vmatpush1.msra.mxu0 0.0
        %897 = vmatprep.subr.mxu0 0.0
        %898 = vmatpush1.msra.mxu0 0.0
        %899 = vmatprep.subr.mxu0 0.0
        %900 = vmatpush1.msra.mxu0 0.0
        %901 = vmatprep.subr.mxu0 0.0
        %902 = vmatpush1.msra.mxu0 0.0
        %903 = vmatprep.subr.mxu0 0.0
        %904 = vmatpush1.msra.mxu0 0.0
        %905 = vmatprep.subr.mxu0 0.0
        %906 = vmatpush1.msra.mxu0 0.0
        %907 = vmatprep.subr.mxu0 0.0
        %908 = vmatpush1.msra.mxu0 0.0
        %909 = vmatprep.subr.mxu0 0.0
        %910 = vmatpush1.msra.mxu0 0.0
        %911 = vmatprep.subr.mxu0 0.0
        %912 = vmatpush1.msra.mxu0 0.0
        %913 = vmatprep.subr.mxu0 0.0
        %914 = vmatpush1.msra.mxu0 0.0
        %915 = vmatprep.subr.mxu0 0.0
        %916 = vmatpush1.msra.mxu0 0.0
        %917 = vmatprep.subr.mxu0 0.0
        %918 = vmatpush1.msra.mxu0 0.0
        %919 = vmatprep.subr.mxu0 0.0
        %920 = vmatpush1.msra.mxu0 0.0
        %921 = vmatprep.subr.mxu0 0.0
        %922 = vmatpush1.msra.mxu0 0.0
        %923 = vmatprep.subr.mxu0 0.0
        %924 = vmatpush1.msra.mxu0 0.0
        %925 = vmatprep.subr.mxu0 0.0
        %926 = vmatpush1.msra.mxu0 0.0
        %927 = vmatprep.subr.mxu0 0.0
        %928 = vmatpush1.msra.mxu0 0.0
        %929 = vmatprep.subr.mxu0 0.0
        %930 = vmatpush1.msra.mxu0 0.0
        %931 = vmatprep.subr.mxu0 0.0
        %932 = vmatpush1.msra.mxu0 0.0
        %933 = vmatprep.subr.mxu0 0.0
        %934 = vmatpush1.msra.mxu0 0.0
        %935 = vmatprep.subr.mxu0 0.0
        %936 = vmatpush1.msra.mxu0 0.0
        %937 = vmatprep.subr.mxu0 0.0
        %938 = vmatpush1.msra.mxu0 0.0
        %939 = vmatprep.subr.mxu0 0.0
        %940 = vmatpush1.msra.mxu0 0.0
        %941 = vmatprep.subr.mxu0 0.0
        %942 = vmatpush1.msra.mxu0 0.0
        %943 = vmatprep.subr.mxu0 0.0
        %944 = vmatpush1.msra.mxu0 0.0
        %945 = vmatprep.subr.mxu0 0.0
        %946 = vmatpush1.msra.mxu0 0.0
        %947 = vmatprep.subr.mxu0 0.0
        %948 = vmatpush1.msra.mxu0 0.0
        %949 = vmatprep.mubr.f32.mxu0 0.0
        %950 = vmatmul.mubr.f32.gmra.mrb[0].mxu0 %v280
        %v951 = vpop.f32.mrb[0].mxu0
        %v952 = vadd.f32 %v276, %v951
        %v953 = vpop.f32.mrb[0].mxu0
        %v954 = vadd.f32 %v276, %v953
        %955 = vdwg.mxu0
        %956 = vmatprep.subr.mxu0 %v884
        %957 = vmatpush1.msra.mxu0 %v883
        %958 = vmatprep.subr.mxu0 0.0
        %959 = vmatpush1.msra.mxu0 0.0
        %960 = vmatprep.subr.mxu0 0.0
        %961 = vmatpush1.msra.mxu0 0.0
        %962 = vmatprep.subr.mxu0 0.0
        %963 = vmatpush1.msra.mxu0 0.0
        %964 = vmatprep.subr.mxu0 0.0
        %965 = vmatpush1.msra.mxu0 0.0
        %966 = vmatprep.subr.mxu0 0.0
        %967 = vmatpush1.msra.mxu0 0.0
        %968 = vmatprep.subr.mxu0 0.0
        %969 = vmatpush1.msra.mxu0 0.0
        %970 = vmatprep.subr.mxu0 0.0
        %971 = vmatpush1.msra.mxu0 0.0
        %972 = vmatprep.subr.mxu0 0.0
        %973 = vmatpush1.msra.mxu0 0.0
        %974 = vmatprep.subr.mxu0 0.0
        %975 = vmatpush1.msra.mxu0 0.0
        %976 = vmatprep.subr.mxu0 0.0
        %977 = vmatpush1.msra.mxu0 0.0
        %978 = vmatprep.subr.mxu0 0.0
        %979 = vmatpush1.msra.mxu0 0.0
        %980 = vmatprep.subr.mxu0 0.0
        %981 = vmatpush1.msra.mxu0 0.0
        %982 = vmatprep.subr.mxu0 0.0
        %983 = vmatpush1.msra.mxu0 0.0
        %984 = vmatprep.subr.mxu0 0.0
        %985 = vmatpush1.msra.mxu0 0.0
        %986 = vmatprep.subr.mxu0 0.0
        %987 = vmatpush1.msra.mxu0 0.0
        %988 = vmatprep.subr.mxu0 0.0
        %989 = vmatpush1.msra.mxu0 0.0
        %990 = vmatprep.subr.mxu0 0.0
        %991 = vmatpush1.msra.mxu0 0.0
        %992 = vmatprep.subr.mxu0 0.0
        %993 = vmatpush1.msra.mxu0 0.0
        %994 = vmatprep.subr.mxu0 0.0
        %995 = vmatpush1.msra.mxu0 0.0
        %996 = vmatprep.subr.mxu0 0.0
        %997 = vmatpush1.msra.mxu0 0.0
        %998 = vmatprep.subr.mxu0 0.0
        %999 = vmatpush1.msra.mxu0 0.0
        %1000 = vmatprep.subr.mxu0 0.0
        %1001 = vmatpush1.msra.mxu0 0.0
        %1002 = vmatprep.subr.mxu0 0.0
        %1003 = vmatpush1.msra.mxu0 0.0
        %1004 = vmatprep.subr.mxu0 0.0
        %1005 = vmatpush1.msra.mxu0 0.0
        %1006 = vmatprep.subr.mxu0 0.0
        %1007 = vmatpush1.msra.mxu0 0.0
        %1008 = vmatprep.subr.mxu0 0.0
        %1009 = vmatpush1.msra.mxu0 0.0
        %1010 = vmatprep.subr.mxu0 0.0
        %1011 = vmatpush1.msra.mxu0 0.0
        %1012 = vmatprep.subr.mxu0 0.0
        %1013 = vmatpush1.msra.mxu0 0.0
        %1014 = vmatprep.subr.mxu0 0.0
        %1015 = vmatpush1.msra.mxu0 0.0
        %1016 = vmatprep.subr.mxu0 0.0
        %1017 = vmatpush1.msra.mxu0 0.0
        %1018 = vmatprep.subr.mxu0 0.0
        %1019 = vmatpush1.msra.mxu0 0.0
        %1020 = vmatprep.mubr.f32.mxu0 0.0
        %1021 = vmatmul.mubr.f32.gmra.mrb[0].mxu0 %v280
        %v1022 = vpop.f32.mrb[0].mxu0
        %v1023 = vadd.f32 %v276, %v1022
        %v1024 = vpop.f32.mrb[0].mxu0
        %v1025 = vadd.f32 %v276, %v1024
        %1026 = vdwg.mxu0
        %v1027 = vmax.f32 %v952, 0.0
        %v1028 = vmax.f32 %v954, 0.0
        %v1029 = vmax.f32 %v1023, 0.0
        %v1030 = vmax.f32 %v1025, 0.0
        %s1031 = scalar_lea.vmem %s3, 8
        %v1032 = vld [vmem:[%s1031] sm:$0xf]
        %v1034 = vsel %vm278, %v1032, 0
        %1036 = vmatprep.subr.mxu0 %v1028
        %1037 = vmatpush1.msra.mxu0 %v1027
        %1038 = vmatprep.subr.mxu0 0.0
        %1039 = vmatpush1.msra.mxu0 0.0
        %1040 = vmatprep.subr.mxu0 0.0
        %1041 = vmatpush1.msra.mxu0 0.0
        %1042 = vmatprep.subr.mxu0 0.0
        %1043 = vmatpush1.msra.mxu0 0.0
        %1044 = vmatprep.subr.mxu0 0.0
        %1045 = vmatpush1.msra.mxu0 0.0
        %1046 = vmatprep.subr.mxu0 0.0
        %1047 = vmatpush1.msra.mxu0 0.0
        %1048 = vmatprep.subr.mxu0 0.0
        %1049 = vmatpush1.msra.mxu0 0.0
        %1050 = vmatprep.subr.mxu0 0.0
        %1051 = vmatpush1.msra.mxu0 0.0
        %1052 = vmatprep.subr.mxu0 0.0
        %1053 = vmatpush1.msra.mxu0 0.0
        %1054 = vmatprep.subr.mxu0 0.0
        %1055 = vmatpush1.msra.mxu0 0.0
        %1056 = vmatprep.subr.mxu0 0.0
        %1057 = vmatpush1.msra.mxu0 0.0
        %1058 = vmatprep.subr.mxu0 0.0
        %1059 = vmatpush1.msra.mxu0 0.0
        %1060 = vmatprep.subr.mxu0 0.0
        %1061 = vmatpush1.msra.mxu0 0.0
        %1062 = vmatprep.subr.mxu0 0.0
        %1063 = vmatpush1.msra.mxu0 0.0
        %1064 = vmatprep.subr.mxu0 0.0
        %1065 = vmatpush1.msra.mxu0 0.0
        %1066 = vmatprep.subr.mxu0 0.0
        %1067 = vmatpush1.msra.mxu0 0.0
        %1068 = vmatprep.subr.mxu0 0.0
        %1069 = vmatpush1.msra.mxu0 0.0
        %1070 = vmatprep.subr.mxu0 0.0
        %1071 = vmatpush1.msra.mxu0 0.0
        %1072 = vmatprep.subr.mxu0 0.0
        %1073 = vmatpush1.msra.mxu0 0.0
        %1074 = vmatprep.subr.mxu0 0.0
        %1075 = vmatpush1.msra.mxu0 0.0
        %1076 = vmatprep.subr.mxu0 0.0
        %1077 = vmatpush1.msra.mxu0 0.0
        %1078 = vmatprep.subr.mxu0 0.0
        %1079 = vmatpush1.msra.mxu0 0.0
        %1080 = vmatprep.subr.mxu0 0.0
        %1081 = vmatpush1.msra.mxu0 0.0
        %1082 = vmatprep.subr.mxu0 0.0
        %1083 = vmatpush1.msra.mxu0 0.0
        %1084 = vmatprep.subr.mxu0 0.0
        %1085 = vmatpush1.msra.mxu0 0.0
        %1086 = vmatprep.subr.mxu0 0.0
        %1087 = vmatpush1.msra.mxu0 0.0
        %1088 = vmatprep.subr.mxu0 0.0
        %1089 = vmatpush1.msra.mxu0 0.0
        %1090 = vmatprep.subr.mxu0 0.0
        %1091 = vmatpush1.msra.mxu0 0.0
        %1092 = vmatprep.subr.mxu0 0.0
        %1093 = vmatpush1.msra.mxu0 0.0
        %1094 = vmatprep.subr.mxu0 0.0
        %1095 = vmatpush1.msra.mxu0 0.0
        %1096 = vmatprep.subr.mxu0 0.0
        %1097 = vmatpush1.msra.mxu0 0.0
        %1098 = vmatprep.subr.mxu0 0.0
        %1099 = vmatpush1.msra.mxu0 0.0
        %1100 = vmatprep.mubr.f32.mxu0 0.0
        %1101 = vmatmul.mubr.f32.gmra.mrb[0].mxu0 %v1034
        %v1102 = vpop.f32.mrb[0].mxu0
        %v1103 = vadd.f32 0.0, %v1102
        %v1104 = vpop.f32.mrb[0].mxu0
        %v1105 = vadd.f32 0.0, %v1104
        %1106 = vdwg.mxu0
        %1107 = vmatprep.subr.mxu0 %v1030
        %1108 = vmatpush1.msra.mxu0 %v1029
        %1109 = vmatprep.subr.mxu0 0.0
        %1110 = vmatpush1.msra.mxu0 0.0
        %1111 = vmatprep.subr.mxu0 0.0
        %1112 = vmatpush1.msra.mxu0 0.0
        %1113 = vmatprep.subr.mxu0 0.0
        %1114 = vmatpush1.msra.mxu0 0.0
        %1115 = vmatprep.subr.mxu0 0.0
        %1116 = vmatpush1.msra.mxu0 0.0
        %1117 = vmatprep.subr.mxu0 0.0
        %1118 = vmatpush1.msra.mxu0 0.0
        %1119 = vmatprep.subr.mxu0 0.0
        %1120 = vmatpush1.msra.mxu0 0.0
        %1121 = vmatprep.subr.mxu0 0.0
        %1122 = vmatpush1.msra.mxu0 0.0
        %1123 = vmatprep.subr.mxu0 0.0
        %1124 = vmatpush1.msra.mxu0 0.0
        %1125 = vmatprep.subr.mxu0 0.0
        %1126 = vmatpush1.msra.mxu0 0.0
        %1127 = vmatprep.subr.mxu0 0.0
        %1128 = vmatpush1.msra.mxu0 0.0
        %1129 = vmatprep.subr.mxu0 0.0
        %1130 = vmatpush1.msra.mxu0 0.0
        %1131 = vmatprep.subr.mxu0 0.0
        %1132 = vmatpush1.msra.mxu0 0.0
        %1133 = vmatprep.subr.mxu0 0.0
        %1134 = vmatpush1.msra.mxu0 0.0
        %1135 = vmatprep.subr.mxu0 0.0
        %1136 = vmatpush1.msra.mxu0 0.0
        %1137 = vmatprep.subr.mxu0 0.0
        %1138 = vmatpush1.msra.mxu0 0.0
        %1139 = vmatprep.subr.mxu0 0.0
        %1140 = vmatpush1.msra.mxu0 0.0
        %1141 = vmatprep.subr.mxu0 0.0
        %1142 = vmatpush1.msra.mxu0 0.0
        %1143 = vmatprep.subr.mxu0 0.0
        %1144 = vmatpush1.msra.mxu0 0.0
        %1145 = vmatprep.subr.mxu0 0.0
        %1146 = vmatpush1.msra.mxu0 0.0
        %1147 = vmatprep.subr.mxu0 0.0
        %1148 = vmatpush1.msra.mxu0 0.0
        %1149 = vmatprep.subr.mxu0 0.0
        %1150 = vmatpush1.msra.mxu0 0.0
        %1151 = vmatprep.subr.mxu0 0.0
        %1152 = vmatpush1.msra.mxu0 0.0
        %1153 = vmatprep.subr.mxu0 0.0
        %1154 = vmatpush1.msra.mxu0 0.0
        %1155 = vmatprep.subr.mxu0 0.0
        %1156 = vmatpush1.msra.mxu0 0.0
        %1157 = vmatprep.subr.mxu0 0.0
        %1158 = vmatpush1.msra.mxu0 0.0
        %1159 = vmatprep.subr.mxu0 0.0
        %1160 = vmatpush1.msra.mxu0 0.0
        %1161 = vmatprep.subr.mxu0 0.0
        %1162 = vmatpush1.msra.mxu0 0.0
        %1163 = vmatprep.subr.mxu0 0.0
        %1164 = vmatpush1.msra.mxu0 0.0
        %1165 = vmatprep.subr.mxu0 0.0
        %1166 = vmatpush1.msra.mxu0 0.0
        %1167 = vmatprep.subr.mxu0 0.0
        %1168 = vmatpush1.msra.mxu0 0.0
        %1169 = vmatprep.subr.mxu0 0.0
        %1170 = vmatpush1.msra.mxu0 0.0
        %1171 = vmatprep.mubr.f32.mxu0 0.0
        %1172 = vmatmul.mubr.f32.gmra.mrb[0].mxu0 %v1034
        %v1173 = vpop.f32.mrb[0].mxu0
        %v1174 = vadd.f32 0.0, %v1173
        %v1175 = vpop.f32.mrb[0].mxu0
        %v1176 = vadd.f32 0.0, %v1175
        %1177 = vdwg.mxu0
        %v1178 = vadd.f32 %v801, %v1103
        %v1179 = vadd.f32 %v803, %v1105
        %v1180 = vadd.f32 %v872, %v1174
        %v1181 = vadd.f32 %v874, %v1176
        %s1182 = scalar_lea.vmem %s234, 96 [#allocation2]
        %v1183 = vld [vmem:[%s1182] sm:$0xff]
        %v1184 = vld [vmem:[%s1182 + $0x8] sm:$0xff]
        %v1185 = vld [vmem:[%s1182 + $0x10] sm:$0xff]
        %v1186 = vld [vmem:[%s1182 + $0x18] sm:$0xff]
        %v1187 = vmax.f32 %v1183, 0.0
        %v1188 = vmax.f32 %v1184, 0.0
        %v1189 = vmax.f32 %v1185, 0.0
        %v1190 = vmax.f32 %v1186, 0.0
        %1191 = vmatprep.subr.mxu0 %v1188
        %1192 = vmatpush1.msra.mxu0 %v1187
        %1193 = vmatprep.subr.mxu0 0.0
        %1194 = vmatpush1.msra.mxu0 0.0
        %1195 = vmatprep.subr.mxu0 0.0
        %1196 = vmatpush1.msra.mxu0 0.0
        %1197 = vmatprep.subr.mxu0 0.0
        %1198 = vmatpush1.msra.mxu0 0.0
        %1199 = vmatprep.subr.mxu0 0.0
        %1200 = vmatpush1.msra.mxu0 0.0
        %1201 = vmatprep.subr.mxu0 0.0
        %1202 = vmatpush1.msra.mxu0 0.0
        %1203 = vmatprep.subr.mxu0 0.0
        %1204 = vmatpush1.msra.mxu0 0.0
        %1205 = vmatprep.subr.mxu0 0.0
        %1206 = vmatpush1.msra.mxu0 0.0
        %1207 = vmatprep.subr.mxu0 0.0
        %1208 = vmatpush1.msra.mxu0 0.0
        %1209 = vmatprep.subr.mxu0 0.0
        %1210 = vmatpush1.msra.mxu0 0.0
        %1211 = vmatprep.subr.mxu0 0.0
        %1212 = vmatpush1.msra.mxu0 0.0
        %1213 = vmatprep.subr.mxu0 0.0
        %1214 = vmatpush1.msra.mxu0 0.0
        %1215 = vmatprep.subr.mxu0 0.0
        %1216 = vmatpush1.msra.mxu0 0.0
        %1217 = vmatprep.subr.mxu0 0.0
        %1218 = vmatpush1.msra.mxu0 0.0
        %1219 = vmatprep.subr.mxu0 0.0
        %1220 = vmatpush1.msra.mxu0 0.0
        %1221 = vmatprep.subr.mxu0 0.0
        %1222 = vmatpush1.msra.mxu0 0.0
        %1223 = vmatprep.subr.mxu0 0.0
        %1224 = vmatpush1.msra.mxu0 0.0
        %1225 = vmatprep.subr.mxu0 0.0
        %1226 = vmatpush1.msra.mxu0 0.0
        %1227 = vmatprep.subr.mxu0 0.0
        %1228 = vmatpush1.msra.mxu0 0.0
        %1229 = vmatprep.subr.mxu0 0.0
        %1230 = vmatpush1.msra.mxu0 0.0
        %1231 = vmatprep.subr.mxu0 0.0
        %1232 = vmatpush1.msra.mxu0 0.0
        %1233 = vmatprep.subr.mxu0 0.0
        %1234 = vmatpush1.msra.mxu0 0.0
        %1235 = vmatprep.subr.mxu0 0.0
        %1236 = vmatpush1.msra.mxu0 0.0
        %1237 = vmatprep.subr.mxu0 0.0
        %1238 = vmatpush1.msra.mxu0 0.0
        %1239 = vmatprep.subr.mxu0 0.0
        %1240 = vmatpush1.msra.mxu0 0.0
        %1241 = vmatprep.subr.mxu0 0.0
        %1242 = vmatpush1.msra.mxu0 0.0
        %1243 = vmatprep.subr.mxu0 0.0
        %1244 = vmatpush1.msra.mxu0 0.0
        %1245 = vmatprep.subr.mxu0 0.0
        %1246 = vmatpush1.msra.mxu0 0.0
        %1247 = vmatprep.subr.mxu0 0.0
        %1248 = vmatpush1.msra.mxu0 0.0
        %1249 = vmatprep.subr.mxu0 0.0
        %1250 = vmatpush1.msra.mxu0 0.0
        %1251 = vmatprep.subr.mxu0 0.0
        %1252 = vmatpush1.msra.mxu0 0.0
        %1253 = vmatprep.subr.mxu0 0.0
        %1254 = vmatpush1.msra.mxu0 0.0
        %1255 = vmatprep.mubr.f32.mxu0 0.0
        %1256 = vmatmul.mubr.f32.gmra.mrb[0].mxu0 %v280
        %v1257 = vpop.f32.mrb[0].mxu0
        %v1258 = vadd.f32 %v276, %v1257
        %v1259 = vpop.f32.mrb[0].mxu0
        %v1260 = vadd.f32 %v276, %v1259
        %1261 = vdwg.mxu0
        %1262 = vmatprep.subr.mxu0 %v1190
        %1263 = vmatpush1.msra.mxu0 %v1189
        %1264 = vmatprep.subr.mxu0 0.0
        %1265 = vmatpush1.msra.mxu0 0.0
        %1266 = vmatprep.subr.mxu0 0.0
        %1267 = vmatpush1.msra.mxu0 0.0
        %1268 = vmatprep.subr.mxu0 0.0
        %1269 = vmatpush1.msra.mxu0 0.0
        %1270 = vmatprep.subr.mxu0 0.0
        %1271 = vmatpush1.msra.mxu0 0.0
        %1272 = vmatprep.subr.mxu0 0.0
        %1273 = vmatpush1.msra.mxu0 0.0
        %1274 = vmatprep.subr.mxu0 0.0
        %1275 = vmatpush1.msra.mxu0 0.0
        %1276 = vmatprep.subr.mxu0 0.0
        %1277 = vmatpush1.msra.mxu0 0.0
        %1278 = vmatprep.subr.mxu0 0.0
        %1279 = vmatpush1.msra.mxu0 0.0
        %1280 = vmatprep.subr.mxu0 0.0
        %1281 = vmatpush1.msra.mxu0 0.0
        %1282 = vmatprep.subr.mxu0 0.0
        %1283 = vmatpush1.msra.mxu0 0.0
        %1284 = vmatprep.subr.mxu0 0.0
        %1285 = vmatpush1.msra.mxu0 0.0
        %1286 = vmatprep.subr.mxu0 0.0
        %1287 = vmatpush1.msra.mxu0 0.0
        %1288 = vmatprep.subr.mxu0 0.0
        %1289 = vmatpush1.msra.mxu0 0.0
        %1290 = vmatprep.subr.mxu0 0.0
        %1291 = vmatpush1.msra.mxu0 0.0
        %1292 = vmatprep.subr.mxu0 0.0
        %1293 = vmatpush1.msra.mxu0 0.0
        %1294 = vmatprep.subr.mxu0 0.0
        %1295 = vmatpush1.msra.mxu0 0.0
        %1296 = vmatprep.subr.mxu0 0.0
        %1297 = vmatpush1.msra.mxu0 0.0
        %1298 = vmatprep.subr.mxu0 0.0
        %1299 = vmatpush1.msra.mxu0 0.0
        %1300 = vmatprep.subr.mxu0 0.0
        %1301 = vmatpush1.msra.mxu0 0.0
        %1302 = vmatprep.subr.mxu0 0.0
        %1303 = vmatpush1.msra.mxu0 0.0
        %1304 = vmatprep.subr.mxu0 0.0
        %1305 = vmatpush1.msra.mxu0 0.0
        %1306 = vmatprep.subr.mxu0 0.0
        %1307 = vmatpush1.msra.mxu0 0.0
        %1308 = vmatprep.subr.mxu0 0.0
        %1309 = vmatpush1.msra.mxu0 0.0
        %1310 = vmatprep.subr.mxu0 0.0
        %1311 = vmatpush1.msra.mxu0 0.0
        %1312 = vmatprep.subr.mxu0 0.0
        %1313 = vmatpush1.msra.mxu0 0.0
        %1314 = vmatprep.subr.mxu0 0.0
        %1315 = vmatpush1.msra.mxu0 0.0
        %1316 = vmatprep.subr.mxu0 0.0
        %1317 = vmatpush1.msra.mxu0 0.0
        %1318 = vmatprep.subr.mxu0 0.0
        %1319 = vmatpush1.msra.mxu0 0.0
        %1320 = vmatprep.subr.mxu0 0.0
        %1321 = vmatpush1.msra.mxu0 0.0
        %1322 = vmatprep.subr.mxu0 0.0
        %1323 = vmatpush1.msra.mxu0 0.0
        %1324 = vmatprep.subr.mxu0 0.0
        %1325 = vmatpush1.msra.mxu0 0.0
        %1326 = vmatprep.mubr.f32.mxu0 0.0
        %1327 = vmatmul.mubr.f32.gmra.mrb[0].mxu0 %v280
        %v1328 = vpop.f32.mrb[0].mxu0
        %v1329 = vadd.f32 %v276, %v1328
        %v1330 = vpop.f32.mrb[0].mxu0
        %v1331 = vadd.f32 %v276, %v1330
        %1332 = vdwg.mxu0
        %v1333 = vmax.f32 %v1258, 0.0
        %v1334 = vmax.f32 %v1260, 0.0
        %v1335 = vmax.f32 %v1329, 0.0
        %v1336 = vmax.f32 %v1331, 0.0
        %s1337 = scalar_lea.vmem %s3, 12
        %v1338 = vld [vmem:[%s1337] sm:$0xf]
        %v1340 = vsel %vm278, %v1338, 0
        %1342 = vmatprep.subr.mxu0 %v1334
        %1343 = vmatpush1.msra.mxu0 %v1333
        %1344 = vmatprep.subr.mxu0 0.0
        %1345 = vmatpush1.msra.mxu0 0.0
        %1346 = vmatprep.subr.mxu0 0.0
        %1347 = vmatpush1.msra.mxu0 0.0
        %1348 = vmatprep.subr.mxu0 0.0
        %1349 = vmatpush1.msra.mxu0 0.0
        %1350 = vmatprep.subr.mxu0 0.0
        %1351 = vmatpush1.msra.mxu0 0.0
        %1352 = vmatprep.subr.mxu0 0.0
        %1353 = vmatpush1.msra.mxu0 0.0
        %1354 = vmatprep.subr.mxu0 0.0
        %1355 = vmatpush1.msra.mxu0 0.0
        %1356 = vmatprep.subr.mxu0 0.0
        %1357 = vmatpush1.msra.mxu0 0.0
        %1358 = vmatprep.subr.mxu0 0.0
        %1359 = vmatpush1.msra.mxu0 0.0
        %1360 = vmatprep.subr.mxu0 0.0
        %1361 = vmatpush1.msra.mxu0 0.0
        %1362 = vmatprep.subr.mxu0 0.0
        %1363 = vmatpush1.msra.mxu0 0.0
        %1364 = vmatprep.subr.mxu0 0.0
        %1365 = vmatpush1.msra.mxu0 0.0
        %1366 = vmatprep.subr.mxu0 0.0
        %1367 = vmatpush1.msra.mxu0 0.0
        %1368 = vmatprep.subr.mxu0 0.0
        %1369 = vmatpush1.msra.mxu0 0.0
        %1370 = vmatprep.subr.mxu0 0.0
        %1371 = vmatpush1.msra.mxu0 0.0
        %1372 = vmatprep.subr.mxu0 0.0
        %1373 = vmatpush1.msra.mxu0 0.0
        %1374 = vmatprep.subr.mxu0 0.0
        %1375 = vmatpush1.msra.mxu0 0.0
        %1376 = vmatprep.subr.mxu0 0.0
        %1377 = vmatpush1.msra.mxu0 0.0
        %1378 = vmatprep.subr.mxu0 0.0
        %1379 = vmatpush1.msra.mxu0 0.0
        %1380 = vmatprep.subr.mxu0 0.0
        %1381 = vmatpush1.msra.mxu0 0.0
        %1382 = vmatprep.subr.mxu0 0.0
        %1383 = vmatpush1.msra.mxu0 0.0
        %1384 = vmatprep.subr.mxu0 0.0
        %1385 = vmatpush1.msra.mxu0 0.0
        %1386 = vmatprep.subr.mxu0 0.0
        %1387 = vmatpush1.msra.mxu0 0.0
        %1388 = vmatprep.subr.mxu0 0.0
        %1389 = vmatpush1.msra.mxu0 0.0
        %1390 = vmatprep.subr.mxu0 0.0
        %1391 = vmatpush1.msra.mxu0 0.0
        %1392 = vmatprep.subr.mxu0 0.0
        %1393 = vmatpush1.msra.mxu0 0.0
        %1394 = vmatprep.subr.mxu0 0.0
        %1395 = vmatpush1.msra.mxu0 0.0
        %1396 = vmatprep.subr.mxu0 0.0
        %1397 = vmatpush1.msra.mxu0 0.0
        %1398 = vmatprep.subr.mxu0 0.0
        %1399 = vmatpush1.msra.mxu0 0.0
        %1400 = vmatprep.subr.mxu0 0.0
        %1401 = vmatpush1.msra.mxu0 0.0
        %1402 = vmatprep.subr.mxu0 0.0
        %1403 = vmatpush1.msra.mxu0 0.0
        %1404 = vmatprep.subr.mxu0 0.0
        %1405 = vmatpush1.msra.mxu0 0.0
        %1406 = vmatprep.mubr.f32.mxu0 0.0
        %1407 = vmatmul.mubr.f32.gmra.mrb[0].mxu0 %v1340
        %v1408 = vpop.f32.mrb[0].mxu0
        %v1409 = vadd.f32 0.0, %v1408
        %v1410 = vpop.f32.mrb[0].mxu0
        %v1411 = vadd.f32 0.0, %v1410
        %1412 = vdwg.mxu0
        %1413 = vmatprep.subr.mxu0 %v1336
        %1414 = vmatpush1.msra.mxu0 %v1335
        %1415 = vmatprep.subr.mxu0 0.0
        %1416 = vmatpush1.msra.mxu0 0.0
        %1417 = vmatprep.subr.mxu0 0.0
        %1418 = vmatpush1.msra.mxu0 0.0
        %1419 = vmatprep.subr.mxu0 0.0
        %1420 = vmatpush1.msra.mxu0 0.0
        %1421 = vmatprep.subr.mxu0 0.0
        %1422 = vmatpush1.msra.mxu0 0.0
        %1423 = vmatprep.subr.mxu0 0.0
        %1424 = vmatpush1.msra.mxu0 0.0
        %1425 = vmatprep.subr.mxu0 0.0
        %1426 = vmatpush1.msra.mxu0 0.0
        %1427 = vmatprep.subr.mxu0 0.0
        %1428 = vmatpush1.msra.mxu0 0.0
        %1429 = vmatprep.subr.mxu0 0.0
        %1430 = vmatpush1.msra.mxu0 0.0
        %1431 = vmatprep.subr.mxu0 0.0
        %1432 = vmatpush1.msra.mxu0 0.0
        %1433 = vmatprep.subr.mxu0 0.0
        %1434 = vmatpush1.msra.mxu0 0.0
        %1435 = vmatprep.subr.mxu0 0.0
        %1436 = vmatpush1.msra.mxu0 0.0
        %1437 = vmatprep.subr.mxu0 0.0
        %1438 = vmatpush1.msra.mxu0 0.0
        %1439 = vmatprep.subr.mxu0 0.0
        %1440 = vmatpush1.msra.mxu0 0.0
        %1441 = vmatprep.subr.mxu0 0.0
        %1442 = vmatpush1.msra.mxu0 0.0
        %1443 = vmatprep.subr.mxu0 0.0
        %1444 = vmatpush1.msra.mxu0 0.0
        %1445 = vmatprep.subr.mxu0 0.0
        %1446 = vmatpush1.msra.mxu0 0.0
        %1447 = vmatprep.subr.mxu0 0.0
        %1448 = vmatpush1.msra.mxu0 0.0
        %1449 = vmatprep.subr.mxu0 0.0
        %1450 = vmatpush1.msra.mxu0 0.0
        %1451 = vmatprep.subr.mxu0 0.0
        %1452 = vmatpush1.msra.mxu0 0.0
        %1453 = vmatprep.subr.mxu0 0.0
        %1454 = vmatpush1.msra.mxu0 0.0
        %1455 = vmatprep.subr.mxu0 0.0
        %1456 = vmatpush1.msra.mxu0 0.0
        %1457 = vmatprep.subr.mxu0 0.0
        %1458 = vmatpush1.msra.mxu0 0.0
        %1459 = vmatprep.subr.mxu0 0.0
        %1460 = vmatpush1.msra.mxu0 0.0
        %1461 = vmatprep.subr.mxu0 0.0
        %1462 = vmatpush1.msra.mxu0 0.0
        %1463 = vmatprep.subr.mxu0 0.0
        %1464 = vmatpush1.msra.mxu0 0.0
        %1465 = vmatprep.subr.mxu0 0.0
        %1466 = vmatpush1.msra.mxu0 0.0
        %1467 = vmatprep.subr.mxu0 0.0
        %1468 = vmatpush1.msra.mxu0 0.0
        %1469 = vmatprep.subr.mxu0 0.0
        %1470 = vmatpush1.msra.mxu0 0.0
        %1471 = vmatprep.subr.mxu0 0.0
        %1472 = vmatpush1.msra.mxu0 0.0
        %1473 = vmatprep.subr.mxu0 0.0
        %1474 = vmatpush1.msra.mxu0 0.0
        %1475 = vmatprep.subr.mxu0 0.0
        %1476 = vmatpush1.msra.mxu0 0.0
        %1477 = vmatprep.mubr.f32.mxu0 0.0
        %1478 = vmatmul.mubr.f32.gmra.mrb[0].mxu0 %v1340
        %v1479 = vpop.f32.mrb[0].mxu0
        %v1480 = vadd.f32 0.0, %v1479
        %v1481 = vpop.f32.mrb[0].mxu0
        %v1482 = vadd.f32 0.0, %v1481
        %1483 = vdwg.mxu0
        %v1484 = vadd.f32 %v1178, %v1409
        %v1485 = vadd.f32 %v1179, %v1411
        %v1486 = vadd.f32 %v1180, %v1480
        %v1487 = vadd.f32 %v1181, %v1482
        %v1488 = vld [vmem:[%s4] sm:$0xf]
        %1490 = vset.pattern.permute.xlu0 0
        %1491 = vperm.xlu0 %1490, %v1488
        %v1492 = vpop.permute.xlu0 %1491
        %v1494 = vadd.f32 %v1484, %v1492
        %v1495 = vadd.f32 %v1485, %v1492
        %v1496 = vadd.f32 %v1486, %v1492
        %v1497 = vadd.f32 %v1487, %v1492
        %vm1498 = vcmask 1043456
        %v1499 = vsel %vm1498, %v1494, -inf
        %v1500 = vrot.slane %v1499, 4
        %v1501 = vmax.f32 %v1499, %v1500
        %v1502 = vrot.slane %v1501, 2
        %v1503 = vmax.f32 %v1501, %v1502
        %v1504 = vrot.slane %v1503, 1
        %v1505 = vmax.f32 %v1503, %v1504
        %v1506 = vsel %vm1498, %v1495, -inf
        %v1507 = vrot.slane %v1506, 4
        %v1508 = vmax.f32 %v1506, %v1507
        %v1509 = vrot.slane %v1508, 2
        %v1510 = vmax.f32 %v1508, %v1509
        %v1511 = vrot.slane %v1510, 1
        %v1512 = vmax.f32 %v1510, %v1511
        %v1513 = vsel %vm1498, %v1496, -inf
        %v1514 = vrot.slane %v1513, 4
        %v1515 = vmax.f32 %v1513, %v1514
        %v1516 = vrot.slane %v1515, 2
        %v1517 = vmax.f32 %v1515, %v1516
        %v1518 = vrot.slane %v1517, 1
        %v1519 = vmax.f32 %v1517, %v1518
        %v1520 = vsel %vm1498, %v1497, -inf
        %v1521 = vrot.slane %v1520, 4
        %v1522 = vmax.f32 %v1520, %v1521
        %v1523 = vrot.slane %v1522, 2
        %v1524 = vmax.f32 %v1522, %v1523
        %v1525 = vrot.slane %v1524, 1
        %v1526 = vmax.f32 %v1524, %v1525
        %v1527 = vsub.f32 %v1494, %v1505
        %v1528 = vsub.f32 %v1495, %v1512
        %v1529 = vsub.f32 %v1496, %v1519
        %v1530 = vsub.f32 %v1497, %v1526
        %v1531 = vmul.f32 %v1527, 1.442695
        %v1532 = vpow.pop %v1531
        %v1533 = vmul.f32 %v1528, 1.442695
        %v1534 = vpow.pop %v1533
        %v1535 = vmul.f32 %v1529, 1.442695
        %v1536 = vpow.pop %v1535
        %v1537 = vmul.f32 %v1530, 1.442695
        %v1538 = vpow.pop %v1537
        %v1539 = vsel %vm1498, %v1532, 0.0
        %v1540 = vrot.slane %v1539, 4
        %v1541 = vadd.f32 %v1539, %v1540
        %v1542 = vrot.slane %v1541, 2
        %v1543 = vadd.f32 %v1541, %v1542
        %v1544 = vrot.slane %v1543, 1
        %v1545 = vadd.f32 %v1543, %v1544
        %v1546 = vsel %vm1498, %v1534, 0.0
        %v1547 = vrot.slane %v1546, 4
        %v1548 = vadd.f32 %v1546, %v1547
        %v1549 = vrot.slane %v1548, 2
        %v1550 = vadd.f32 %v1548, %v1549
        %v1551 = vrot.slane %v1550, 1
        %v1552 = vadd.f32 %v1550, %v1551
        %v1553 = vsel %vm1498, %v1536, 0.0
        %v1554 = vrot.slane %v1553, 4
        %v1555 = vadd.f32 %v1553, %v1554
        %v1556 = vrot.slane %v1555, 2
        %v1557 = vadd.f32 %v1555, %v1556
        %v1558 = vrot.slane %v1557, 1
        %v1559 = vadd.f32 %v1557, %v1558
        %v1560 = vsel %vm1498, %v1538, 0.0
        %v1561 = vrot.slane %v1560, 4
        %v1562 = vadd.f32 %v1560, %v1561
        %v1563 = vrot.slane %v1562, 2
        %v1564 = vadd.f32 %v1562, %v1563
        %v1565 = vrot.slane %v1564, 1
        %v1566 = vadd.f32 %v1564, %v1565
        %v1567 = vrcp.pop %v1545
        %v1568 = vmul.f32 %v1532, %v1567
        %v1569 = vrcp.pop %v1552
        %v1570 = vmul.f32 %v1534, %v1569
        %v1571 = vrcp.pop %v1559
        %v1572 = vmul.f32 %v1536, %v1571
        %v1573 = vrcp.pop %v1566
        %v1574 = vmul.f32 %v1538, %v1573
        %v1579 = vcombine.low %v1568, %v1570
        %v1580 = vcombine.low %v1572, %v1574
        %1583 = vst [vmem:[%s260] sm:$0xff] %v1579
        %1584 = vst [vmem:[%s260 + $0x8] sm:$0xff] %v1580
        %s1585 = sand.u32 %s156, 1
        %s1586 = scalar_lea.sflag [#allocation4], %s1585
        %s1587 = sand.u32 %s156, 1
        %s1588 = smul.addr %s1587, 16
        %s1589 = scalar_lea.vmem [#allocation5], %s1588
        // Predicated region
        $region45: #{tpu_custom_call.1} parent=39 // pred_check
          %p1590 = pneg %p166
        $region46: #{tpu_custom_call.1} parent=39 // pred_check_branch
          %1592 = sbr.rel (%p1590) target = $region48
        $region47: #{tpu_custom_call.1} parent=39 // pred_region
          %s1593 = smul.u32 4, %s27
          %s1595 = ssub.s32 256, 256
          %1596 = vsyncadd %s1586, %s1595
          %s1597 = smul.addr %s26, 4
          %s1598 = sadd.s32 %s1593, %s1597
          %s1599 = smul.addr %s1598, 64
          %s1600 = scalar_lea.hbm %s5, %s1599
          %s1602 = sshll.u32 %s1589, 4
          %s1603 = int_to_ptr.vmem [resolvable:$true] %s1602
          %1605 = dma.vmem_to_hbm [thread:$0]  %s1603, 256, %s1600, %s1586
        $region48: #{tpu_custom_call.1} parent=39 // pred_fallthru
          _
      $region40: #{tpu_custom_call.1} parent=5 // pred_fallthru
        _
      %p1606 = scmp.le.s32.totalorder 2, %s17
      // Predicated region
      $region49: #{tpu_custom_call.1} parent=5 // pred_check
        %p1607 = pneg %p1606
      $region50: #{tpu_custom_call.1} parent=5 // pred_check_branch
        %1609 = sbr.rel (%p1607) target = $region52
      $region51: #{tpu_custom_call.1} parent=5 // pred_region
        %s1610 = ssub.s32 %s17, 2
        // Predicated region
        $region53: #{tpu_custom_call.1} parent=51 // pred_check
          %p1611 = pneg %p172
        $region54: #{tpu_custom_call.1} parent=51 // pred_check_branch
          %1613 = sbr.rel (%p1611) target = $region56
        $region55: #{tpu_custom_call.1} parent=51 // pred_region
          %s1614 = sand.u32 %s157, 1
          %s1615 = scalar_lea.sflag [#allocation4], %s1614
          %s1616 = sand.u32 %s157, 1
          %s1617 = smul.addr %s1616, 16
          %s1618 = scalar_lea.vmem [#allocation5], %s1617
          %1619 = dma.done %s1615, 256
        $region56: #{tpu_custom_call.1} parent=51 // pred_fallthru
          _
      $region52: #{tpu_custom_call.1} parent=5 // pred_fallthru
        _
    $region6: #{tpu_custom_call.1} parent=1 // loop_footer
      %s21 = sadd.s32 1, %s17
    $region7: #{tpu_custom_call.1} parent=1 // loop_footer_branch
      %16 = sbr.rel target = $region3
    $region8: #{tpu_custom_call.1} parent=1 // loop_exit
      _
    %1620 = vsyncpa [#allocation3], 1
    %s1621 = scalar_lea.sflag [#allocation3], 1
    %1622 = vsyncpa %s1621, 1
    %1623 = vsyncpa [#allocation4], 1
    %s1624 = scalar_lea.sflag [#allocation4], 1
    %1625 = vsyncpa %s1624, 1

</llo_original>
